<compile_context>
chip_gen: v5e
topology: v5e:2x2
jax: 0.10.0
libtpu: 0.0.40
codegen_flags: <defaults>
</compile_context>

<pallas_src>
import functools

import numpy as np
import jax
import jax.numpy as jnp
from jax import lax
from jax.experimental import pallas as pl
from jax.experimental.pallas import tpu as pltpu

F32 = jnp.float32
BF16 = jnp.bfloat16


# ----------------------------------------------------------------------------
# In-kernel helpers (traced inside the Pallas kernel)
# ----------------------------------------------------------------------------

def _layer_norm(v, g, b):
    mu = jnp.mean(v, axis=-1, keepdims=True)
    var = jnp.mean((v - mu) ** 2, axis=-1, keepdims=True)
    return (v - mu) * lax.rsqrt(var + 1e-5) * g + b


def _ffn_block(t, w1, b1, w2, b2):
    # bf16 MXU matmuls, f32 accumulation, f32 biases.
    h = jnp.dot(t.astype(BF16), w1, preferred_element_type=F32) + b1
    h = jnp.maximum(h, 0.0)
    return jnp.dot(h.astype(BF16), w2, preferred_element_type=F32) + b2


# ----------------------------------------------------------------------------
# Fused GRIT attention + norms/FFN kernel (grid over edge tiles)
# ----------------------------------------------------------------------------

def _grit_kernel(clamp, hd,
                 # ---- inputs -------------------------------------------------
                 x_ref, epe_ref, s_ref, d_ref,
                 wq_w_ref, wq_b_ref, wk_w_ref, wv_w_ref,
                 web_w_ref, web_b_ref, wew_w_ref, wew_b_ref,
                 wo_w_ref, weo_w_ref, aw_full_ref, blk_ones_ref,
                 nff_w1_ref, nff_b1_ref, nff_w2_ref, nff_b2_ref,
                 ln_na_g_ref, ln_na_b_ref, ln_nf_g_ref, ln_nf_b_ref,
                 eff_w1_ref, eff_b1_ref, eff_w2_ref, eff_b2_ref,
                 ln_ea_g_ref, ln_ea_b_ref, ln_ef_g_ref, ln_ef_b_ref,
                 # ---- outputs ------------------------------------------------
                 h_out_ref, e_out_ref,
                 # ---- scratch (persists across edge tiles) -------------------
                 xq_s, xk_s, xv_s, acc_s):
    i = pl.program_id(0)

    # ---- step 0: node q/k/v projections (once) + accumulator init ----------
    @pl.when(i == 0)
    def _():
        xb = x_ref[...].astype(BF16)
        xq_s[...] = (jnp.dot(xb, wq_w_ref[...], preferred_element_type=F32)
                     + wq_b_ref[...]).astype(BF16)
        xk_s[...] = jnp.dot(xb, wk_w_ref[...],
                            preferred_element_type=F32).astype(BF16)
        xv_s[...] = jnp.dot(xb, wv_w_ref[...],
                            preferred_element_type=F32).astype(BF16)
        acc_s[...] = jnp.zeros_like(acc_s)

    # ---- per-edge-tile work -------------------------------------------------
    S = s_ref[...]                       # [tE, N] bf16 one-hot(edge_index[0])
    Dm = d_ref[...]                      # [tE, N] bf16 one-hot(edge_index[1])
    epe = epe_ref[...]                   # [tE, dim] f32
    epe_b = epe.astype(BF16)

    # Gathers as one-hot matmuls (bf16 MXU, f32 accumulation).
    k_e = jnp.dot(S, xk_s[...], preferred_element_type=F32)    # xk[src]
    q_e = jnp.dot(Dm, xq_s[...], preferred_element_type=F32)   # xq[dst]
    v_e = jnp.dot(S, xv_s[...], preferred_element_type=F32)    # xv[src]

    eb = jnp.dot(epe_b, web_w_ref[...],
                 preferred_element_type=F32) + web_b_ref[...]
    ew = jnp.dot(epe_b, wew_w_ref[...],
                 preferred_element_type=F32) + wew_b_ref[...]

    s0 = (k_e + q_e) * ew
    # signed sqrt:  sqrt(relu(s)) - sqrt(relu(-s))  ==  sign(s) * sqrt(|s|)
    s0 = jnp.where(s0 >= 0, jnp.float32(1.0), jnp.float32(-1.0)) * \
        jnp.sqrt(jnp.abs(s0))
    score = jnp.maximum(s0 + eb, 0.0)                 # [tE, HD] == e_out pre-proj

    # Per-head logit sum_d score*Aw broadcast back over head_dim lanes via a
    # block-diagonal ones matmul (lane-major layout, no narrow [E, H] tensors).
    # bf16 operands (blk_ones is exactly 0/1), f32 accumulation.
    sc = jnp.dot((score * aw_full_ref[...]).astype(BF16), blk_ones_ref[...],
                 preferred_element_type=F32)          # [tE, HD]
    sc = jnp.clip(sc, -clamp, clamp)
    # Max-subtraction skipped: sc is clipped to [-clamp, clamp] => exp bounded.
    ex = jnp.exp(sc)                                  # [tE, HD] f32

    # Fused segment-softmax scatter: one transposed-LHS contraction over the
    # edge axis produces [N, 2*HD] = [num | den].  bf16 operands (Dm is 0/1
    # exact, payload values are bounded by the clamp), f32 accumulation.
    payload = jnp.concatenate([v_e * ex, ex], axis=-1).astype(BF16)  # [tE, 2HD]
    acc_s[...] += lax.dot_general(Dm, payload, (((0,), (0,)), ((), ())),
                                  preferred_element_type=F32)

    # Edge output: weo(score) + residual, then LN / FFN / LN (fully fused).
    e_res = jnp.dot(score.astype(BF16), weo_w_ref[...],
                    preferred_element_type=F32) + epe
    t_e = _layer_norm(e_res, ln_ea_g_ref[...], ln_ea_b_ref[...])
    t_e = t_e + _ffn_block(t_e, eff_w1_ref[...], eff_b1_ref[...],
                           eff_w2_ref[...], eff_b2_ref[...])
    e_out_ref[...] = _layer_norm(t_e, ln_ef_g_ref[...], ln_ef_b_ref[...])

    # ---- last step: normalize aggregation, node output path ----------------
    @pl.when(i == pl.num_programs(0) - 1)
    def _():
        num = acc_s[:, :hd]                           # [N, HD]
        den = acc_s[:, hd:]                           # [N, HD] (per-head, repl.)
        # Zero in-degree guard: avoid 0 * (approx 1/eps -> possibly inf) = NaN.
        inv = jnp.where(den > 0.0,
                        pl.reciprocal(den + 1e-16, approx=True),
                        jnp.float32(0.0))
        x_agg = num * inv
        h = jnp.dot(x_agg.astype(BF16), wo_w_ref[...],
                    preferred_element_type=F32) + x_ref[...]
        t_n = _layer_norm(h, ln_na_g_ref[...], ln_na_b_ref[...])
        t_n = t_n + _ffn_block(t_n, nff_w1_ref[...], nff_b1_ref[...],
                               nff_w2_ref[...], nff_b2_ref[...])
        h_out_ref[...] = _layer_norm(t_n, ln_nf_g_ref[...], ln_nf_b_ref[...])


# ----------------------------------------------------------------------------
# Wrapper
# ----------------------------------------------------------------------------

def _round_up(v, m):
    return ((v + m - 1) // m) * m


def _vmem_budget_bytes():
    """Per-generation VMEM budget: 85% of physical capacity (headroom for
    compiler scratch / double buffering). Falls back to a v7x-safe value."""
    cap = 64 * 1024 * 1024
    try:
        info = pltpu.get_tpu_info()
        cap = int(getattr(info, "vmem_capacity_bytes", cap)) or cap
    except Exception:
        pass
    return int(cap * 0.85)


def _choose_tile_e(requested, num_edges, n, dim, hd, budget):
    """Shrink the edge tile so double-buffered edge blocks + persistent node
    scratch stay comfortably inside the VMEM budget."""
    tile = max(8, min(_round_up(requested, 8), _round_up(max(num_edges, 1), 8)))
    persistent = n * (3 * hd * 2 + 2 * hd * 4)          # bf16 q/k/v + f32 acc
    while tile > 8:
        per_tile = tile * (2 * n * 2 + 2 * dim * 4)     # bf16 one-hots + f32 epe/e_out
        if persistent + 2 * per_tile <= budget * 0.6:
            break
        tile = max(8, _round_up(tile // 2, 8))
    return tile


def prepare_graph(edge_index, num_nodes, tile_e):
    """Build the bf16 incidence matrices once per graph (reused across layers)."""
    E = int(edge_index.shape[1])
    e_pad = _round_up(E, tile_e)
    src1h = jax.nn.one_hot(edge_index[0], num_nodes, dtype=BF16)   # [E, N]
    dst1h = jax.nn.one_hot(edge_index[1], num_nodes, dtype=BF16)   # [E, N]
    if e_pad != E:   # zero rows: padded edges contribute nothing to any node
        pad = ((0, e_pad - E), (0, 0))
        src1h = jnp.pad(src1h, pad)
        dst1h = jnp.pad(dst1h, pad)
    return src1h, dst1h, e_pad


def grit_mha_forward(x, epe, edge_index, params, *, n_heads, clamp=5.0,
                     tile_e=256):
    N, dim = x.shape
    E = epe.shape[0]
    assert E >= 1
    assert dim % n_heads == 0
    Dh = dim // n_heads
    HD = n_heads * Dh
    # Removing the softmax max-shift in the kernel relies on a *finite, small*
    # clamp (exp stays well inside f32 range even after edge-summation).
    assert clamp is not None and 0.0 < abs(float(clamp)) <= 50.0, \
        "kernel requires a finite clamp with |clamp| <= 50"

    vmem_budget = _vmem_budget_bytes()
    tile_e = _choose_tile_e(tile_e, E, N, dim, HD, vmem_budget)

    src1h, dst1h, e_pad = prepare_graph(edge_index, N, tile_e)
    n_tiles = e_pad // tile_e
    epe_p = jnp.pad(epe, ((0, e_pad - E), (0, 0))) if e_pad != E else epe

    # Fold Aw [Dh, H] into lane-major helpers (column index = h*Dh + d).
    aw_full = params["Aw"].T.reshape(1, HD).astype(F32)            # [1, HD]
    blk_ones = jnp.kron(jnp.eye(n_heads, dtype=F32),
                        jnp.ones((Dh, Dh), F32)).astype(BF16)      # [HD, HD]

    bf = lambda w: w.astype(BF16)
    inputs = (
        x, epe_p, src1h, dst1h,
        bf(params["wq_w"]), params["wq_b"], bf(params["wk_w"]), bf(params["wv_w"]),
        bf(params["web_w"]), params["web_b"], bf(params["wew_w"]), params["wew_b"],
        bf(params["wo_w"]), bf(params["weo_w"]), aw_full, blk_ones,
        bf(params["nff_w1"]), params["nff_b1"], bf(params["nff_w2"]), params["nff_b2"],
        params["ln_na_g"], params["ln_na_b"], params["ln_nf_g"], params["ln_nf_b"],
        bf(params["eff_w1"]), params["eff_b1"], bf(params["eff_w2"]), params["eff_b2"],
        params["ln_ea_g"], params["ln_ea_b"], params["ln_ef_g"], params["ln_ef_b"],
    )

    def const_spec(a):  # whole array resident in VMEM, loaded once
        return pl.BlockSpec(a.shape, lambda i: (0,) * a.ndim)

    def edge_spec(a):   # tiled along the edge axis
        return pl.BlockSpec((tile_e, a.shape[1]), lambda i: (i, 0))

    in_specs = [const_spec(x), edge_spec(epe_p),
                edge_spec(src1h), edge_spec(dst1h)]
    in_specs += [const_spec(a) for a in inputs[4:]]

    out_shape = (jax.ShapeDtypeStruct((N, dim), F32),
                 jax.ShapeDtypeStruct((e_pad, dim), F32))
    out_specs = (pl.BlockSpec((N, dim), lambda i: (0, 0)),      # written at end
                 pl.BlockSpec((tile_e, dim), lambda i: (i, 0)))

    h_out, e_out = pl.pallas_call(
        functools.partial(_grit_kernel, float(abs(clamp)), HD),
        grid=(n_tiles,),
        out_shape=out_shape,
        in_specs=in_specs,
        out_specs=out_specs,
        scratch_shapes=[
            pltpu.VMEM((N, HD), BF16),       # xq (projected once at step 0)
            pltpu.VMEM((N, HD), BF16),       # xk
            pltpu.VMEM((N, HD), BF16),       # xv
            pltpu.VMEM((N, 2 * HD), F32),    # [softmax numerator | denominator]
        ],
        compiler_params=pltpu.CompilerParams(
            # edge-tile axis carries node accumulators -> must stay sequential
            dimension_semantics=("arbitrary",),
            vmem_limit_bytes=vmem_budget),
    )(*inputs)
    return h_out, e_out[:E]


# ----------------------------------------------------------------------------
# Deterministic parameter init (shapes follow the module __init__)
# ----------------------------------------------------------------------------

def init_params(key, dim, n_heads):
    Dh = dim // n_heads
    HD = n_heads * Dh
    keys = iter(jax.random.split(key, 32))

    def lin(fan_in, fan_out):
        return jax.random.normal(next(keys), (fan_in, fan_out),
                                 jnp.float32) / jnp.sqrt(float(fan_in))

    def bias(n):
        return 0.1 * jax.random.normal(next(keys), (1, n), jnp.float32)

    p = {}
    p["wq_w"] = lin(dim, HD); p["wq_b"] = bias(HD)
    p["wk_w"] = lin(dim, HD)                      # bias=False
    p["wv_w"] = lin(dim, HD)                      # bias=False
    p["web_w"] = lin(dim, HD); p["web_b"] = bias(HD)
    p["wew_w"] = lin(dim, HD); p["wew_b"] = bias(HD)
    p["wo_w"] = lin(HD, dim)                      # bias=False
    p["weo_w"] = lin(HD, dim)                     # bias=False
    # Aw: torch shape (head_dim, n_heads, 1), xavier_normal_ ; stored as [Dh, H]
    p["Aw"] = jax.random.normal(next(keys), (Dh, n_heads), jnp.float32) * \
        np.sqrt(2.0 / (Dh + n_heads))
    p["nff_w1"] = lin(dim, 2 * dim); p["nff_b1"] = bias(2 * dim)
    p["nff_w2"] = lin(2 * dim, dim); p["nff_b2"] = bias(dim)
    p["eff_w1"] = lin(dim, 2 * dim); p["eff_b1"] = bias(2 * dim)
    p["eff_w2"] = lin(2 * dim, dim); p["eff_b2"] = bias(dim)
    ones = jnp.ones((1, dim), jnp.float32)
    zeros = jnp.zeros((1, dim), jnp.float32)
    for name in ("ln_na", "ln_nf", "ln_ea", "ln_ef"):
        p[name + "_g"] = ones
        p[name + "_b"] = zeros
    return p


# ----------------------------------------------------------------------------
# Pure-JAX reference (mirrors the PyTorch forward) for a correctness check
# ----------------------------------------------------------------------------

def grit_mha_reference(x, epe, edge_index, params, *, n_heads, clamp=5.0):
    N, dim = x.shape
    Dh = dim // n_heads
    HD = n_heads * Dh
    src, dst = edge_index[0], edge_index[1]

    xq = x @ params["wq_w"] + params["wq_b"]
    xk = x @ params["wk_w"]
    xv = x @ params["wv_w"]
    k_e, q_e, v_e = xk[src], xq[dst], xv[src]
    eb = epe @ params["web_w"] + params["web_b"]
    ew = epe @ params["wew_w"] + params["wew_b"]
    score = (k_e + q_e) * ew
    score = jnp.sqrt(jax.nn.relu(score)) - jnp.sqrt(jax.nn.relu(-score))
    score = jax.nn.relu(score + eb)
    e_flat = score
    sc = jnp.einsum("ehd,dh->eh", score.reshape(-1, n_heads, Dh), params["Aw"])
    sc = jnp.clip(sc, -clamp, clamp)
    m = jax.ops.segment_max(sc, dst, num_segments=N)
    ex = jnp.exp(sc - m[dst])
    s = jax.ops.segment_sum(ex, dst, num_segments=N)
    attn = ex / (s[dst] + 1e-16)
    msg = v_e.reshape(-1, n_heads, Dh) * attn[:, :, None]
    x_agg = jax.ops.segment_sum(msg.reshape(-1, HD), dst, num_segments=N)
    h = x_agg @ params["wo_w"] + x
    e = e_flat @ params["weo_w"] + epe

    def ln(v, g, b):
        mu = v.mean(-1, keepdims=True)
        var = ((v - mu) ** 2).mean(-1, keepdims=True)
        return (v - mu) / jnp.sqrt(var + 1e-5) * g + b

    def ffn(v, w1, b1, w2, b2):
        return jax.nn.relu(v @ w1 + b1) @ w2 + b2

    t = ln(h, params["ln_na_g"], params["ln_na_b"])
    x_out = ln(t + ffn(t, params["nff_w1"], params["nff_b1"],
                       params["nff_w2"], params["nff_b2"]),
               params["ln_nf_g"], params["ln_nf_b"])
    te = ln(e, params["ln_ea_g"], params["ln_ea_b"])
    e_out = ln(te + ffn(te, params["eff_w1"], params["eff_b1"],
                        params["eff_w2"], params["eff_b2"]),
               params["ln_ef_g"], params["ln_ef_b"])
    return x_out, e_out


# ----------------------------------------------------------------------------
# Main
# ----------------------------------------------------------------------------

if __name__ == "__main__":
    N, dim, H, E = 16, 32, 4, 64     # nodes, embed_dim, num_heads, edges
    key = jax.random.PRNGKey(0)
    kx, ke, kp = jax.random.split(key, 3)
    x = jax.random.normal(kx, (N, dim), jnp.float32)
    node_pair_emb = jax.random.normal(ke, (E, dim), jnp.float32)

    idx = np.arange(E)
    edge_index = jnp.asarray(
        np.stack([(7 * idx + 3) % N, (5 * idx + 1) % N]), dtype=jnp.int32)

    # NOTE: dropout(p=0.0) in the module is never applied in forward -> identity.
    params = init_params(kp, dim, H)

    x_out, e_out = grit_mha_forward(x, node_pair_emb, edge_index, params,
                                    n_heads=H, clamp=5.0, tile_e=256)
    jax.block_until_ready((x_out, e_out))

    x_ref, e_ref = grit_mha_reference(x, node_pair_emb, edge_index, params,
                                      n_heads=H, clamp=5.0)
    # Tolerance covers bf16 MXU operands (f32 accumulation), the approximate
    # reciprocal, and the removed softmax max-shift (valid due to +-clamp).
    np.testing.assert_allclose(np.asarray(x_out), np.asarray(x_ref),
                               rtol=5e-2, atol=5e-2)
    np.testing.assert_allclose(np.asarray(e_out), np.asarray(e_ref),
                               rtol=5e-2, atol=5e-2)
    print("KERNEL_OK")
</pallas_src>

<mosaic_0001>
module attributes {stable_mosaic.version = 11 : i64} {
  func.func @_grit_kernel(%arg0: i32, %arg1: memref<16x32xf32, #tpu.memory_space<vmem>>, %arg2: memref<64x32xf32, #tpu.memory_space<vmem>>, %arg3: memref<64x16xbf16, #tpu.memory_space<vmem>>, %arg4: memref<64x16xbf16, #tpu.memory_space<vmem>>, %arg5: memref<32x32xbf16, #tpu.memory_space<vmem>>, %arg6: memref<1x32xf32, #tpu.memory_space<vmem>>, %arg7: memref<32x32xbf16, #tpu.memory_space<vmem>>, %arg8: memref<32x32xbf16, #tpu.memory_space<vmem>>, %arg9: memref<32x32xbf16, #tpu.memory_space<vmem>>, %arg10: memref<1x32xf32, #tpu.memory_space<vmem>>, %arg11: memref<32x32xbf16, #tpu.memory_space<vmem>>, %arg12: memref<1x32xf32, #tpu.memory_space<vmem>>, %arg13: memref<32x32xbf16, #tpu.memory_space<vmem>>, %arg14: memref<32x32xbf16, #tpu.memory_space<vmem>>, %arg15: memref<1x32xf32, #tpu.memory_space<vmem>>, %arg16: memref<32x32xbf16, #tpu.memory_space<vmem>>, %arg17: memref<32x64xbf16, #tpu.memory_space<vmem>>, %arg18: memref<1x64xf32, #tpu.memory_space<vmem>>, %arg19: memref<64x32xbf16, #tpu.memory_space<vmem>>, %arg20: memref<1x32xf32, #tpu.memory_space<vmem>>, %arg21: memref<1x32xf32, #tpu.memory_space<vmem>>, %arg22: memref<1x32xf32, #tpu.memory_space<vmem>>, %arg23: memref<1x32xf32, #tpu.memory_space<vmem>>, %arg24: memref<1x32xf32, #tpu.memory_space<vmem>>, %arg25: memref<32x64xbf16, #tpu.memory_space<vmem>>, %arg26: memref<1x64xf32, #tpu.memory_space<vmem>>, %arg27: memref<64x32xbf16, #tpu.memory_space<vmem>>, %arg28: memref<1x32xf32, #tpu.memory_space<vmem>>, %arg29: memref<1x32xf32, #tpu.memory_space<vmem>>, %arg30: memref<1x32xf32, #tpu.memory_space<vmem>>, %arg31: memref<1x32xf32, #tpu.memory_space<vmem>>, %arg32: memref<1x32xf32, #tpu.memory_space<vmem>>, %arg33: memref<16x32xf32, #tpu.memory_space<vmem>>, %arg34: memref<64x32xf32, #tpu.memory_space<vmem>>, %arg35: memref<16x32xbf16, #tpu.memory_space<vmem>>, %arg36: memref<16x32xbf16, #tpu.memory_space<vmem>>, %arg37: memref<16x32xbf16, #tpu.memory_space<vmem>>, %arg38: memref<16x64xf32, #tpu.memory_space<vmem>>) attributes {dimension_semantics = [#tpu.dimension_semantics<arbitrary>], iteration_bounds = array<i64: 1>, scalar_prefetch = 0 : i64, scratch_operands = 4 : i64, tpu.core_type = #tpu.core_type<tc>, window_params = [{pipeline_mode = #tpu.pipeline_mode<synchronous>, transform_indices = @transform_0, window_bounds = array<i64: 16, 32>}, {transform_indices = @transform_1, window_bounds = array<i64: 64, 32>}, {transform_indices = @transform_2, window_bounds = array<i64: 64, 16>}, {transform_indices = @transform_3, window_bounds = array<i64: 64, 16>}, {pipeline_mode = #tpu.pipeline_mode<synchronous>, transform_indices = @transform_4, window_bounds = array<i64: 32, 32>}, {pipeline_mode = #tpu.pipeline_mode<synchronous>, transform_indices = @transform_5, window_bounds = array<i64: 1, 32>}, {pipeline_mode = #tpu.pipeline_mode<synchronous>, transform_indices = @transform_6, window_bounds = array<i64: 32, 32>}, {pipeline_mode = #tpu.pipeline_mode<synchronous>, transform_indices = @transform_7, window_bounds = array<i64: 32, 32>}, {pipeline_mode = #tpu.pipeline_mode<synchronous>, transform_indices = @transform_8, window_bounds = array<i64: 32, 32>}, {pipeline_mode = #tpu.pipeline_mode<synchronous>, transform_indices = @transform_9, window_bounds = array<i64: 1, 32>}, {pipeline_mode = #tpu.pipeline_mode<synchronous>, transform_indices = @transform_10, window_bounds = array<i64: 32, 32>}, {pipeline_mode = #tpu.pipeline_mode<synchronous>, transform_indices = @transform_11, window_bounds = array<i64: 1, 32>}, {pipeline_mode = #tpu.pipeline_mode<synchronous>, transform_indices = @transform_12, window_bounds = array<i64: 32, 32>}, {pipeline_mode = #tpu.pipeline_mode<synchronous>, transform_indices = @transform_13, window_bounds = array<i64: 32, 32>}, {pipeline_mode = #tpu.pipeline_mode<synchronous>, transform_indices = @transform_14, window_bounds = array<i64: 1, 32>}, {pipeline_mode = #tpu.pipeline_mode<synchronous>, transform_indices = @transform_15, window_bounds = array<i64: 32, 32>}, {pipeline_mode = #tpu.pipeline_mode<synchronous>, transform_indices = @transform_16, window_bounds = array<i64: 32, 64>}, {pipeline_mode = #tpu.pipeline_mode<synchronous>, transform_indices = @transform_17, window_bounds = array<i64: 1, 64>}, {pipeline_mode = #tpu.pipeline_mode<synchronous>, transform_indices = @transform_18, window_bounds = array<i64: 64, 32>}, {pipeline_mode = #tpu.pipeline_mode<synchronous>, transform_indices = @transform_19, window_bounds = array<i64: 1, 32>}, {pipeline_mode = #tpu.pipeline_mode<synchronous>, transform_indices = @transform_20, window_bounds = array<i64: 1, 32>}, {pipeline_mode = #tpu.pipeline_mode<synchronous>, transform_indices = @transform_21, window_bounds = array<i64: 1, 32>}, {pipeline_mode = #tpu.pipeline_mode<synchronous>, transform_indices = @transform_22, window_bounds = array<i64: 1, 32>}, {pipeline_mode = #tpu.pipeline_mode<synchronous>, transform_indices = @transform_23, window_bounds = array<i64: 1, 32>}, {pipeline_mode = #tpu.pipeline_mode<synchronous>, transform_indices = @transform_24, window_bounds = array<i64: 32, 64>}, {pipeline_mode = #tpu.pipeline_mode<synchronous>, transform_indices = @transform_25, window_bounds = array<i64: 1, 64>}, {pipeline_mode = #tpu.pipeline_mode<synchronous>, transform_indices = @transform_26, window_bounds = array<i64: 64, 32>}, {pipeline_mode = #tpu.pipeline_mode<synchronous>, transform_indices = @transform_27, window_bounds = array<i64: 1, 32>}, {pipeline_mode = #tpu.pipeline_mode<synchronous>, transform_indices = @transform_28, window_bounds = array<i64: 1, 32>}, {pipeline_mode = #tpu.pipeline_mode<synchronous>, transform_indices = @transform_29, window_bounds = array<i64: 1, 32>}, {pipeline_mode = #tpu.pipeline_mode<synchronous>, transform_indices = @transform_30, window_bounds = array<i64: 1, 32>}, {pipeline_mode = #tpu.pipeline_mode<synchronous>, transform_indices = @transform_31, window_bounds = array<i64: 1, 32>}, {pipeline_mode = #tpu.pipeline_mode<synchronous>, transform_indices = @transform_32, window_bounds = array<i64: 16, 32>}, {transform_indices = @transform_33, window_bounds = array<i64: 64, 32>}]} {
    %c0_i32 = arith.constant 0 : i32
    %0 = arith.cmpi eq, %arg0, %c0_i32 : i32
    %1 = arith.extui %0 : i1 to i32
    %c0_i32_0 = arith.constant 0 : i32
    %2 = arith.cmpi ne, %1, %c0_i32_0 : i32
    scf.if %2 {
      %c0_76 = arith.constant 0 : index
      %c0_77 = arith.constant 0 : index
      %125 = vector.load %arg1[%c0_76, %c0_77] : memref<16x32xf32, #tpu.memory_space<vmem>>, vector<16x32xf32>
      %126 = arith.truncf %125 : vector<16x32xf32> to vector<16x32xbf16>
      %c0_78 = arith.constant 0 : index
      %c0_79 = arith.constant 0 : index
      %127 = vector.load %arg5[%c0_78, %c0_79] : memref<32x32xbf16, #tpu.memory_space<vmem>>, vector<32x32xbf16>
      %cst_80 = arith.constant dense<0.000000e+00> : vector<16x32xf32>
      %128 = tpu.matmul %126, %127, %cst_80 {dimension_numbers = #tpu.dot_dimension_numbers<[1], [0], [0], [1], [0, 0, 1, 1], [], []>} : vector<16x32xbf16>, vector<32x32xbf16>, vector<16x32xf32> -> vector<16x32xf32>
      %c0_81 = arith.constant 0 : index
      %c0_82 = arith.constant 0 : index
      %129 = vector.load %arg6[%c0_81, %c0_82] : memref<1x32xf32, #tpu.memory_space<vmem>>, vector<1x32xf32>
      %130 = vector.broadcast %129 : vector<1x32xf32> to vector<16x32xf32>
      %131 = arith.addf %128, %130 : vector<16x32xf32>
      %132 = arith.truncf %131 : vector<16x32xf32> to vector<16x32xbf16>
      %c0_83 = arith.constant 0 : index
      %c0_84 = arith.constant 0 : index
      %133 = vector.load %arg35[%c0_83, %c0_84] : memref<16x32xbf16, #tpu.memory_space<vmem>>, vector<16x32xbf16>
      tpu.vector_store %arg35[%c0_83, %c0_84], %132 {strides = array<i32>} : memref<16x32xbf16, #tpu.memory_space<vmem>>, vector<16x32xbf16>,
      %c0_85 = arith.constant 0 : index
      %c0_86 = arith.constant 0 : index
      %134 = vector.load %arg7[%c0_85, %c0_86] : memref<32x32xbf16, #tpu.memory_space<vmem>>, vector<32x32xbf16>
      %cst_87 = arith.constant dense<0.000000e+00> : vector<16x32xf32>
      %135 = tpu.matmul %126, %134, %cst_87 {dimension_numbers = #tpu.dot_dimension_numbers<[1], [0], [0], [1], [0, 0, 1, 1], [], []>} : vector<16x32xbf16>, vector<32x32xbf16>, vector<16x32xf32> -> vector<16x32xf32>
      %136 = arith.truncf %135 : vector<16x32xf32> to vector<16x32xbf16>
      %c0_88 = arith.constant 0 : index
      %c0_89 = arith.constant 0 : index
      %137 = vector.load %arg36[%c0_88, %c0_89] : memref<16x32xbf16, #tpu.memory_space<vmem>>, vector<16x32xbf16>
      tpu.vector_store %arg36[%c0_88, %c0_89], %136 {strides = array<i32>} : memref<16x32xbf16, #tpu.memory_space<vmem>>, vector<16x32xbf16>,
      %c0_90 = arith.constant 0 : index
      %c0_91 = arith.constant 0 : index
      %138 = vector.load %arg8[%c0_90, %c0_91] : memref<32x32xbf16, #tpu.memory_space<vmem>>, vector<32x32xbf16>
      %cst_92 = arith.constant dense<0.000000e+00> : vector<16x32xf32>
      %139 = tpu.matmul %126, %138, %cst_92 {dimension_numbers = #tpu.dot_dimension_numbers<[1], [0], [0], [1], [0, 0, 1, 1], [], []>} : vector<16x32xbf16>, vector<32x32xbf16>, vector<16x32xf32> -> vector<16x32xf32>
      %140 = arith.truncf %139 : vector<16x32xf32> to vector<16x32xbf16>
      %c0_93 = arith.constant 0 : index
      %c0_94 = arith.constant 0 : index
      %141 = vector.load %arg37[%c0_93, %c0_94] : memref<16x32xbf16, #tpu.memory_space<vmem>>, vector<16x32xbf16>
      tpu.vector_store %arg37[%c0_93, %c0_94], %140 {strides = array<i32>} : memref<16x32xbf16, #tpu.memory_space<vmem>>, vector<16x32xbf16>,
      %cst_95 = arith.constant 0.000000e+00 : f32
      %142 = vector.broadcast %cst_95 : f32 to vector<16x64xf32>
      %c0_96 = arith.constant 0 : index
      %c0_97 = arith.constant 0 : index
      %143 = vector.load %arg38[%c0_96, %c0_97] : memref<16x64xf32, #tpu.memory_space<vmem>>, vector<16x64xf32>
      tpu.vector_store %arg38[%c0_96, %c0_97], %142 {strides = array<i32>} : memref<16x64xf32, #tpu.memory_space<vmem>>, vector<16x64xf32>,
    } else {
    }
    %c0 = arith.constant 0 : index
    %c0_1 = arith.constant 0 : index
    %3 = vector.load %arg3[%c0, %c0_1] : memref<64x16xbf16, #tpu.memory_space<vmem>>, vector<64x16xbf16>
    %c0_2 = arith.constant 0 : index
    %c0_3 = arith.constant 0 : index
    %4 = vector.load %arg4[%c0_2, %c0_3] : memref<64x16xbf16, #tpu.memory_space<vmem>>, vector<64x16xbf16>
    %c0_4 = arith.constant 0 : index
    %c0_5 = arith.constant 0 : index
    %5 = vector.load %arg2[%c0_4, %c0_5] : memref<64x32xf32, #tpu.memory_space<vmem>>, vector<64x32xf32>
    %6 = arith.truncf %5 : vector<64x32xf32> to vector<64x32xbf16>
    %c0_6 = arith.constant 0 : index
    %c0_7 = arith.constant 0 : index
    %7 = vector.load %arg36[%c0_6, %c0_7] : memref<16x32xbf16, #tpu.memory_space<vmem>>, vector<16x32xbf16>
    %cst = arith.constant dense<0.000000e+00> : vector<64x32xf32>
    %8 = tpu.matmul %3, %7, %cst {dimension_numbers = #tpu.dot_dimension_numbers<[1], [0], [0], [1], [0, 0, 1, 1], [], []>} : vector<64x16xbf16>, vector<16x32xbf16>, vector<64x32xf32> -> vector<64x32xf32>
    %c0_8 = arith.constant 0 : index
    %c0_9 = arith.constant 0 : index
    %9 = vector.load %arg35[%c0_8, %c0_9] : memref<16x32xbf16, #tpu.memory_space<vmem>>, vector<16x32xbf16>
    %cst_10 = arith.constant dense<0.000000e+00> : vector<64x32xf32>
    %10 = tpu.matmul %4, %9, %cst_10 {dimension_numbers = #tpu.dot_dimension_numbers<[1], [0], [0], [1], [0, 0, 1, 1], [], []>} : vector<64x16xbf16>, vector<16x32xbf16>, vector<64x32xf32> -> vector<64x32xf32>
    %c0_11 = arith.constant 0 : index
    %c0_12 = arith.constant 0 : index
    %11 = vector.load %arg37[%c0_11, %c0_12] : memref<16x32xbf16, #tpu.memory_space<vmem>>, vector<16x32xbf16>
    %cst_13 = arith.constant dense<0.000000e+00> : vector<64x32xf32>
    %12 = tpu.matmul %3, %11, %cst_13 {dimension_numbers = #tpu.dot_dimension_numbers<[1], [0], [0], [1], [0, 0, 1, 1], [], []>} : vector<64x16xbf16>, vector<16x32xbf16>, vector<64x32xf32> -> vector<64x32xf32>
    %c0_14 = arith.constant 0 : index
    %c0_15 = arith.constant 0 : index
    %13 = vector.load %arg9[%c0_14, %c0_15] : memref<32x32xbf16, #tpu.memory_space<vmem>>, vector<32x32xbf16>
    %cst_16 = arith.constant dense<0.000000e+00> : vector<64x32xf32>
    %14 = tpu.matmul %6, %13, %cst_16 {dimension_numbers = #tpu.dot_dimension_numbers<[1], [0], [0], [1], [0, 0, 1, 1], [], []>} : vector<64x32xbf16>, vector<32x32xbf16>, vector<64x32xf32> -> vector<64x32xf32>
    %c0_17 = arith.constant 0 : index
    %c0_18 = arith.constant 0 : index
    %15 = vector.load %arg10[%c0_17, %c0_18] : memref<1x32xf32, #tpu.memory_space<vmem>>, vector<1x32xf32>
    %16 = vector.broadcast %15 : vector<1x32xf32> to vector<64x32xf32>
    %17 = arith.addf %14, %16 : vector<64x32xf32>
    %c0_19 = arith.constant 0 : index
    %c0_20 = arith.constant 0 : index
    %18 = vector.load %arg11[%c0_19, %c0_20] : memref<32x32xbf16, #tpu.memory_space<vmem>>, vector<32x32xbf16>
    %cst_21 = arith.constant dense<0.000000e+00> : vector<64x32xf32>
    %19 = tpu.matmul %6, %18, %cst_21 {dimension_numbers = #tpu.dot_dimension_numbers<[1], [0], [0], [1], [0, 0, 1, 1], [], []>} : vector<64x32xbf16>, vector<32x32xbf16>, vector<64x32xf32> -> vector<64x32xf32>
    %c0_22 = arith.constant 0 : index
    %c0_23 = arith.constant 0 : index
    %20 = vector.load %arg12[%c0_22, %c0_23] : memref<1x32xf32, #tpu.memory_space<vmem>>, vector<1x32xf32>
    %21 = vector.broadcast %20 : vector<1x32xf32> to vector<64x32xf32>
    %22 = arith.addf %19, %21 : vector<64x32xf32>
    %23 = arith.addf %8, %10 : vector<64x32xf32>
    %24 = arith.mulf %23, %22 : vector<64x32xf32>
    %cst_24 = arith.constant 0.000000e+00 : f32
    %25 = vector.broadcast %cst_24 : f32 to vector<64x32xf32>
    %26 = arith.cmpf oge, %24, %25 : vector<64x32xf32>
    %cst_25 = arith.constant 1.000000e+00 : f32
    %cst_26 = arith.constant -1.000000e+00 : f32
    %27 = vector.broadcast %cst_25 : f32 to vector<64x32xf32>
    %28 = vector.broadcast %cst_26 : f32 to vector<64x32xf32>
    %29 = arith.select %26, %27, %28 : vector<64x32xi1>, vector<64x32xf32>
    %30 = math.absf %24 : vector<64x32xf32>
    %31 = math.sqrt %30 : vector<64x32xf32>
    %32 = arith.mulf %29, %31 : vector<64x32xf32>
    %33 = arith.addf %32, %17 : vector<64x32xf32>
    %cst_27 = arith.constant 0.000000e+00 : f32
    %34 = vector.broadcast %cst_27 : f32 to vector<64x32xf32>
    %35 = arith.maximumf %33, %34 : vector<64x32xf32>
    %c0_28 = arith.constant 0 : index
    %c0_29 = arith.constant 0 : index
    %36 = vector.load %arg15[%c0_28, %c0_29] : memref<1x32xf32, #tpu.memory_space<vmem>>, vector<1x32xf32>
    %37 = vector.broadcast %36 : vector<1x32xf32> to vector<64x32xf32>
    %38 = arith.mulf %35, %37 : vector<64x32xf32>
    %39 = arith.truncf %38 : vector<64x32xf32> to vector<64x32xbf16>
    %c0_30 = arith.constant 0 : index
    %c0_31 = arith.constant 0 : index
    %40 = vector.load %arg16[%c0_30, %c0_31] : memref<32x32xbf16, #tpu.memory_space<vmem>>, vector<32x32xbf16>
    %cst_32 = arith.constant dense<0.000000e+00> : vector<64x32xf32>
    %41 = tpu.matmul %39, %40, %cst_32 {dimension_numbers = #tpu.dot_dimension_numbers<[1], [0], [0], [1], [0, 0, 1, 1], [], []>} : vector<64x32xbf16>, vector<32x32xbf16>, vector<64x32xf32> -> vector<64x32xf32>
    %cst_33 = arith.constant -5.000000e+00 : f32
    %cst_34 = arith.constant 5.000000e+00 : f32
    %42 = vector.broadcast %cst_33 : f32 to vector<64x32xf32>
    %43 = arith.maximumf %42, %41 : vector<64x32xf32>
    %44 = vector.broadcast %cst_34 : f32 to vector<64x32xf32>
    %45 = arith.minimumf %44, %43 : vector<64x32xf32>
    %46 = math.exp %45 : vector<64x32xf32>
    %47 = arith.mulf %12, %46 : vector<64x32xf32>
    %48 = tpu.concatenate %47, %46 in 1 : vector<64x32xf32>, vector<64x32xf32> -> vector<64x64xf32>
    %49 = arith.truncf %48 : vector<64x64xf32> to vector<64x64xbf16>
    %c0_35 = arith.constant 0 : index
    %c0_36 = arith.constant 0 : index
    %50 = vector.load %arg38[%c0_35, %c0_36] : memref<16x64xf32, #tpu.memory_space<vmem>>, vector<16x64xf32>
    %cst_37 = arith.constant dense<0.000000e+00> : vector<16x64xf32>
    %51 = tpu.matmul %4, %49, %cst_37 {dimension_numbers = #tpu.dot_dimension_numbers<[0], [0], [1], [1], [0, 1, 1, 1], [], []>} : vector<64x16xbf16>, vector<64x64xbf16>, vector<16x64xf32> -> vector<16x64xf32>
    %52 = arith.addf %50, %51 : vector<16x64xf32>
    %c0_38 = arith.constant 0 : index
    %c0_39 = arith.constant 0 : index
    %53 = vector.load %arg38[%c0_38, %c0_39] : memref<16x64xf32, #tpu.memory_space<vmem>>, vector<16x64xf32>
    tpu.vector_store %arg38[%c0_38, %c0_39], %52 {strides = array<i32>} : memref<16x64xf32, #tpu.memory_space<vmem>>, vector<16x64xf32>,
    %54 = arith.truncf %35 : vector<64x32xf32> to vector<64x32xbf16>
    %c0_40 = arith.constant 0 : index
    %c0_41 = arith.constant 0 : index
    %55 = vector.load %arg14[%c0_40, %c0_41] : memref<32x32xbf16, #tpu.memory_space<vmem>>, vector<32x32xbf16>
    %cst_42 = arith.constant dense<0.000000e+00> : vector<64x32xf32>
    %56 = tpu.matmul %54, %55, %cst_42 {dimension_numbers = #tpu.dot_dimension_numbers<[1], [0], [0], [1], [0, 0, 1, 1], [], []>} : vector<64x32xbf16>, vector<32x32xbf16>, vector<64x32xf32> -> vector<64x32xf32>
    %57 = arith.addf %56, %5 : vector<64x32xf32>
    %c0_43 = arith.constant 0 : index
    %c0_44 = arith.constant 0 : index
    %58 = vector.load %arg29[%c0_43, %c0_44] : memref<1x32xf32, #tpu.memory_space<vmem>>, vector<1x32xf32>
    %c0_45 = arith.constant 0 : index
    %c0_46 = arith.constant 0 : index
    %59 = vector.load %arg30[%c0_45, %c0_46] : memref<1x32xf32, #tpu.memory_space<vmem>>, vector<1x32xf32>
    %cst_47 = arith.constant dense<0.000000e+00> : vector<64xf32>
    %60 = vector.multi_reduction <add>, %57, %cst_47 [1] : vector<64x32xf32> to vector<64xf32>
    %61 = vector.shape_cast %60 : vector<64xf32> to vector<64x1xf32>
    %cst_48 = arith.constant 3.200000e+01 : f32
    %62 = vector.broadcast %cst_48 : f32 to vector<64x1xf32>
    %63 = arith.divf %61, %62 : vector<64x1xf32>
    %64 = vector.broadcast %63 : vector<64x1xf32> to vector<64x32xf32>
    %65 = arith.subf %57, %64 : vector<64x32xf32>
    %66 = arith.mulf %65, %65 : vector<64x32xf32>
    %cst_49 = arith.constant dense<0.000000e+00> : vector<64xf32>
    %67 = vector.multi_reduction <add>, %66, %cst_49 [1] : vector<64x32xf32> to vector<64xf32>
    %68 = vector.shape_cast %67 : vector<64xf32> to vector<64x1xf32>
    %cst_50 = arith.constant 3.200000e+01 : f32
    %69 = vector.broadcast %cst_50 : f32 to vector<64x1xf32>
    %70 = arith.divf %68, %69 : vector<64x1xf32>
    %71 = vector.broadcast %63 : vector<64x1xf32> to vector<64x32xf32>
    %72 = arith.subf %57, %71 : vector<64x32xf32>
    %cst_51 = arith.constant 9.99999974E-6 : f32
    %73 = vector.broadcast %cst_51 : f32 to vector<64x1xf32>
    %74 = arith.addf %70, %73 : vector<64x1xf32>
    %75 = math.rsqrt %74 : vector<64x1xf32>
    %76 = vector.broadcast %75 : vector<64x1xf32> to vector<64x32xf32>
    %77 = arith.mulf %72, %76 : vector<64x32xf32>
    %78 = vector.broadcast %58 : vector<1x32xf32> to vector<64x32xf32>
    %79 = arith.mulf %77, %78 : vector<64x32xf32>
    %80 = vector.broadcast %59 : vector<1x32xf32> to vector<64x32xf32>
    %81 = arith.addf %79, %80 : vector<64x32xf32>
    %c0_52 = arith.constant 0 : index
    %c0_53 = arith.constant 0 : index
    %82 = vector.load %arg25[%c0_52, %c0_53] : memref<32x64xbf16, #tpu.memory_space<vmem>>, vector<32x64xbf16>
    %c0_54 = arith.constant 0 : index
    %c0_55 = arith.constant 0 : index
    %83 = vector.load %arg26[%c0_54, %c0_55] : memref<1x64xf32, #tpu.memory_space<vmem>>, vector<1x64xf32>
    %c0_56 = arith.constant 0 : index
    %c0_57 = arith.constant 0 : index
    %84 = vector.load %arg27[%c0_56, %c0_57] : memref<64x32xbf16, #tpu.memory_space<vmem>>, vector<64x32xbf16>
    %c0_58 = arith.constant 0 : index
    %c0_59 = arith.constant 0 : index
    %85 = vector.load %arg28[%c0_58, %c0_59] : memref<1x32xf32, #tpu.memory_space<vmem>>, vector<1x32xf32>
    %86 = arith.truncf %81 : vector<64x32xf32> to vector<64x32xbf16>
    %cst_60 = arith.constant dense<0.000000e+00> : vector<64x64xf32>
    %87 = tpu.matmul %86, %82, %cst_60 {dimension_numbers = #tpu.dot_dimension_numbers<[1], [0], [0], [1], [0, 0, 1, 1], [], []>} : vector<64x32xbf16>, vector<32x64xbf16>, vector<64x64xf32> -> vector<64x64xf32>
    %88 = vector.broadcast %83 : vector<1x64xf32> to vector<64x64xf32>
    %89 = arith.addf %87, %88 : vector<64x64xf32>
    %cst_61 = arith.constant 0.000000e+00 : f32
    %90 = vector.broadcast %cst_61 : f32 to vector<64x64xf32>
    %91 = arith.maximumf %89, %90 : vector<64x64xf32>
    %92 = arith.truncf %91 : vector<64x64xf32> to vector<64x64xbf16>
    %cst_62 = arith.constant dense<0.000000e+00> : vector<64x32xf32>
    %93 = tpu.matmul %92, %84, %cst_62 {dimension_numbers = #tpu.dot_dimension_numbers<[1], [0], [0], [1], [0, 0, 1, 1], [], []>} : vector<64x64xbf16>, vector<64x32xbf16>, vector<64x32xf32> -> vector<64x32xf32>
    %94 = vector.broadcast %85 : vector<1x32xf32> to vector<64x32xf32>
    %95 = arith.addf %93, %94 : vector<64x32xf32>
    %96 = arith.addf %81, %95 : vector<64x32xf32>
    %c0_63 = arith.constant 0 : index
    %c0_64 = arith.constant 0 : index
    %97 = vector.load %arg31[%c0_63, %c0_64] : memref<1x32xf32, #tpu.memory_space<vmem>>, vector<1x32xf32>
    %c0_65 = arith.constant 0 : index
    %c0_66 = arith.constant 0 : index
    %98 = vector.load %arg32[%c0_65, %c0_66] : memref<1x32xf32, #tpu.memory_space<vmem>>, vector<1x32xf32>
    %cst_67 = arith.constant dense<0.000000e+00> : vector<64xf32>
    %99 = vector.multi_reduction <add>, %96, %cst_67 [1] : vector<64x32xf32> to vector<64xf32>
    %100 = vector.shape_cast %99 : vector<64xf32> to vector<64x1xf32>
    %cst_68 = arith.constant 3.200000e+01 : f32
    %101 = vector.broadcast %cst_68 : f32 to vector<64x1xf32>
    %102 = arith.divf %100, %101 : vector<64x1xf32>
    %103 = vector.broadcast %102 : vector<64x1xf32> to vector<64x32xf32>
    %104 = arith.subf %96, %103 : vector<64x32xf32>
    %105 = arith.mulf %104, %104 : vector<64x32xf32>
    %cst_69 = arith.constant dense<0.000000e+00> : vector<64xf32>
    %106 = vector.multi_reduction <add>, %105, %cst_69 [1] : vector<64x32xf32> to vector<64xf32>
    %107 = vector.shape_cast %106 : vector<64xf32> to vector<64x1xf32>
    %cst_70 = arith.constant 3.200000e+01 : f32
    %108 = vector.broadcast %cst_70 : f32 to vector<64x1xf32>
    %109 = arith.divf %107, %108 : vector<64x1xf32>
    %110 = vector.broadcast %102 : vector<64x1xf32> to vector<64x32xf32>
    %111 = arith.subf %96, %110 : vector<64x32xf32>
    %cst_71 = arith.constant 9.99999974E-6 : f32
    %112 = vector.broadcast %cst_71 : f32 to vector<64x1xf32>
    %113 = arith.addf %109, %112 : vector<64x1xf32>
    %114 = math.rsqrt %113 : vector<64x1xf32>
    %115 = vector.broadcast %114 : vector<64x1xf32> to vector<64x32xf32>
    %116 = arith.mulf %111, %115 : vector<64x32xf32>
    %117 = vector.broadcast %97 : vector<1x32xf32> to vector<64x32xf32>
    %118 = arith.mulf %116, %117 : vector<64x32xf32>
    %119 = vector.broadcast %98 : vector<1x32xf32> to vector<64x32xf32>
    %120 = arith.addf %118, %119 : vector<64x32xf32>
    %c0_72 = arith.constant 0 : index
    %c0_73 = arith.constant 0 : index
    %121 = vector.load %arg34[%c0_72, %c0_73] : memref<64x32xf32, #tpu.memory_space<vmem>>, vector<64x32xf32>
    tpu.vector_store %arg34[%c0_72, %c0_73], %120 {strides = array<i32>} : memref<64x32xf32, #tpu.memory_space<vmem>>, vector<64x32xf32>,
    %c0_i32_74 = arith.constant 0 : i32
    %122 = arith.cmpi eq, %arg0, %c0_i32_74 : i32
    %123 = arith.extui %122 : i1 to i32
    %c0_i32_75 = arith.constant 0 : i32
    %124 = arith.cmpi ne, %123, %c0_i32_75 : i32
    scf.if %124 {
      %c0_76 = arith.constant 0 : index
      %c0_77 = arith.constant 0 : index
      %125 = vector.load %arg38[%c0_76, %c0_77] : memref<16x64xf32, #tpu.memory_space<vmem>>, vector<16x32xf32>
      %c0_78 = arith.constant 0 : index
      %c32 = arith.constant 32 : index
      %126 = vector.load %arg38[%c0_78, %c32] : memref<16x64xf32, #tpu.memory_space<vmem>>, vector<16x32xf32>
      %cst_79 = arith.constant 0.000000e+00 : f32
      %127 = vector.broadcast %cst_79 : f32 to vector<16x32xf32>
      %128 = arith.cmpf ogt, %126, %127 : vector<16x32xf32>
      %cst_80 = arith.constant 1.000000e-16 : f32
      %129 = vector.broadcast %cst_80 : f32 to vector<16x32xf32>
      %130 = arith.addf %126, %129 : vector<16x32xf32>
      %131 = tpu.reciprocal %130 {approx = true} : vector<16x32xf32> -> vector<16x32xf32>
      %cst_81 = arith.constant 0.000000e+00 : f32
      %132 = vector.broadcast %cst_81 : f32 to vector<16x32xf32>
      %133 = arith.select %128, %131, %132 : vector<16x32xi1>, vector<16x32xf32>
      %134 = arith.mulf %125, %133 : vector<16x32xf32>
      %135 = arith.truncf %134 : vector<16x32xf32> to vector<16x32xbf16>
      %c0_82 = arith.constant 0 : index
      %c0_83 = arith.constant 0 : index
      %136 = vector.load %arg13[%c0_82, %c0_83] : memref<32x32xbf16, #tpu.memory_space<vmem>>, vector<32x32xbf16>
      %cst_84 = arith.constant dense<0.000000e+00> : vector<16x32xf32>
      %137 = tpu.matmul %135, %136, %cst_84 {dimension_numbers = #tpu.dot_dimension_numbers<[1], [0], [0], [1], [0, 0, 1, 1], [], []>} : vector<16x32xbf16>, vector<32x32xbf16>, vector<16x32xf32> -> vector<16x32xf32>
      %c0_85 = arith.constant 0 : index
      %c0_86 = arith.constant 0 : index
      %138 = vector.load %arg1[%c0_85, %c0_86] : memref<16x32xf32, #tpu.memory_space<vmem>>, vector<16x32xf32>
      %139 = arith.addf %137, %138 : vector<16x32xf32>
      %c0_87 = arith.constant 0 : index
      %c0_88 = arith.constant 0 : index
      %140 = vector.load %arg21[%c0_87, %c0_88] : memref<1x32xf32, #tpu.memory_space<vmem>>, vector<1x32xf32>
      %c0_89 = arith.constant 0 : index
      %c0_90 = arith.constant 0 : index
      %141 = vector.load %arg22[%c0_89, %c0_90] : memref<1x32xf32, #tpu.memory_space<vmem>>, vector<1x32xf32>
      %cst_91 = arith.constant dense<0.000000e+00> : vector<16xf32>
      %142 = vector.multi_reduction <add>, %139, %cst_91 [1] : vector<16x32xf32> to vector<16xf32>
      %143 = vector.shape_cast %142 : vector<16xf32> to vector<16x1xf32>
      %cst_92 = arith.constant 3.200000e+01 : f32
      %144 = vector.broadcast %cst_92 : f32 to vector<16x1xf32>
      %145 = arith.divf %143, %144 : vector<16x1xf32>
      %146 = vector.broadcast %145 : vector<16x1xf32> to vector<16x32xf32>
      %147 = arith.subf %139, %146 : vector<16x32xf32>
      %148 = arith.mulf %147, %147 : vector<16x32xf32>
      %cst_93 = arith.constant dense<0.000000e+00> : vector<16xf32>
      %149 = vector.multi_reduction <add>, %148, %cst_93 [1] : vector<16x32xf32> to vector<16xf32>
      %150 = vector.shape_cast %149 : vector<16xf32> to vector<16x1xf32>
      %cst_94 = arith.constant 3.200000e+01 : f32
      %151 = vector.broadcast %cst_94 : f32 to vector<16x1xf32>
      %152 = arith.divf %150, %151 : vector<16x1xf32>
      %153 = vector.broadcast %145 : vector<16x1xf32> to vector<16x32xf32>
      %154 = arith.subf %139, %153 : vector<16x32xf32>
      %cst_95 = arith.constant 9.99999974E-6 : f32
      %155 = vector.broadcast %cst_95 : f32 to vector<16x1xf32>
      %156 = arith.addf %152, %155 : vector<16x1xf32>
      %157 = math.rsqrt %156 : vector<16x1xf32>
      %158 = vector.broadcast %157 : vector<16x1xf32> to vector<16x32xf32>
      %159 = arith.mulf %154, %158 : vector<16x32xf32>
      %160 = vector.broadcast %140 : vector<1x32xf32> to vector<16x32xf32>
      %161 = arith.mulf %159, %160 : vector<16x32xf32>
      %162 = vector.broadcast %141 : vector<1x32xf32> to vector<16x32xf32>
      %163 = arith.addf %161, %162 : vector<16x32xf32>
      %c0_96 = arith.constant 0 : index
      %c0_97 = arith.constant 0 : index
      %164 = vector.load %arg17[%c0_96, %c0_97] : memref<32x64xbf16, #tpu.memory_space<vmem>>, vector<32x64xbf16>
      %c0_98 = arith.constant 0 : index
      %c0_99 = arith.constant 0 : index
      %165 = vector.load %arg18[%c0_98, %c0_99] : memref<1x64xf32, #tpu.memory_space<vmem>>, vector<1x64xf32>
      %c0_100 = arith.constant 0 : index
      %c0_101 = arith.constant 0 : index
      %166 = vector.load %arg19[%c0_100, %c0_101] : memref<64x32xbf16, #tpu.memory_space<vmem>>, vector<64x32xbf16>
      %c0_102 = arith.constant 0 : index
      %c0_103 = arith.constant 0 : index
      %167 = vector.load %arg20[%c0_102, %c0_103] : memref<1x32xf32, #tpu.memory_space<vmem>>, vector<1x32xf32>
      %168 = arith.truncf %163 : vector<16x32xf32> to vector<16x32xbf16>
      %cst_104 = arith.constant dense<0.000000e+00> : vector<16x64xf32>
      %169 = tpu.matmul %168, %164, %cst_104 {dimension_numbers = #tpu.dot_dimension_numbers<[1], [0], [0], [1], [0, 0, 1, 1], [], []>} : vector<16x32xbf16>, vector<32x64xbf16>, vector<16x64xf32> -> vector<16x64xf32>
      %170 = vector.broadcast %165 : vector<1x64xf32> to vector<16x64xf32>
      %171 = arith.addf %169, %170 : vector<16x64xf32>
      %cst_105 = arith.constant 0.000000e+00 : f32
      %172 = vector.broadcast %cst_105 : f32 to vector<16x64xf32>
      %173 = arith.maximumf %171, %172 : vector<16x64xf32>
      %174 = arith.truncf %173 : vector<16x64xf32> to vector<16x64xbf16>
      %cst_106 = arith.constant dense<0.000000e+00> : vector<16x32xf32>
      %175 = tpu.matmul %174, %166, %cst_106 {dimension_numbers = #tpu.dot_dimension_numbers<[1], [0], [0], [1], [0, 0, 1, 1], [], []>} : vector<16x64xbf16>, vector<64x32xbf16>, vector<16x32xf32> -> vector<16x32xf32>
      %176 = vector.broadcast %167 : vector<1x32xf32> to vector<16x32xf32>
      %177 = arith.addf %175, %176 : vector<16x32xf32>
      %178 = arith.addf %163, %177 : vector<16x32xf32>
      %c0_107 = arith.constant 0 : index
      %c0_108 = arith.constant 0 : index
      %179 = vector.load %arg23[%c0_107, %c0_108] : memref<1x32xf32, #tpu.memory_space<vmem>>, vector<1x32xf32>
      %c0_109 = arith.constant 0 : index
      %c0_110 = arith.constant 0 : index
      %180 = vector.load %arg24[%c0_109, %c0_110] : memref<1x32xf32, #tpu.memory_space<vmem>>, vector<1x32xf32>
      %cst_111 = arith.constant dense<0.000000e+00> : vector<16xf32>
      %181 = vector.multi_reduction <add>, %178, %cst_111 [1] : vector<16x32xf32> to vector<16xf32>
      %182 = vector.shape_cast %181 : vector<16xf32> to vector<16x1xf32>
      %cst_112 = arith.constant 3.200000e+01 : f32
      %183 = vector.broadcast %cst_112 : f32 to vector<16x1xf32>
      %184 = arith.divf %182, %183 : vector<16x1xf32>
      %185 = vector.broadcast %184 : vector<16x1xf32> to vector<16x32xf32>
      %186 = arith.subf %178, %185 : vector<16x32xf32>
      %187 = arith.mulf %186, %186 : vector<16x32xf32>
      %cst_113 = arith.constant dense<0.000000e+00> : vector<16xf32>
      %188 = vector.multi_reduction <add>, %187, %cst_113 [1] : vector<16x32xf32> to vector<16xf32>
      %189 = vector.shape_cast %188 : vector<16xf32> to vector<16x1xf32>
      %cst_114 = arith.constant 3.200000e+01 : f32
      %190 = vector.broadcast %cst_114 : f32 to vector<16x1xf32>
      %191 = arith.divf %189, %190 : vector<16x1xf32>
      %192 = vector.broadcast %184 : vector<16x1xf32> to vector<16x32xf32>
      %193 = arith.subf %178, %192 : vector<16x32xf32>
      %cst_115 = arith.constant 9.99999974E-6 : f32
      %194 = vector.broadcast %cst_115 : f32 to vector<16x1xf32>
      %195 = arith.addf %191, %194 : vector<16x1xf32>
      %196 = math.rsqrt %195 : vector<16x1xf32>
      %197 = vector.broadcast %196 : vector<16x1xf32> to vector<16x32xf32>
      %198 = arith.mulf %193, %197 : vector<16x32xf32>
      %199 = vector.broadcast %179 : vector<1x32xf32> to vector<16x32xf32>
      %200 = arith.mulf %198, %199 : vector<16x32xf32>
      %201 = vector.broadcast %180 : vector<1x32xf32> to vector<16x32xf32>
      %202 = arith.addf %200, %201 : vector<16x32xf32>
      %c0_116 = arith.constant 0 : index
      %c0_117 = arith.constant 0 : index
      %203 = vector.load %arg33[%c0_116, %c0_117] : memref<16x32xf32, #tpu.memory_space<vmem>>, vector<16x32xf32>
      tpu.vector_store %arg33[%c0_116, %c0_117], %202 {strides = array<i32>} : memref<16x32xf32, #tpu.memory_space<vmem>>, vector<16x32xf32>,
    } else {
    }
    return
  }
  func.func @transform_0(%arg0: i32) -> (i32, i32) {
    %c0_i32 = arith.constant 0 : i32
    %c0_i32_0 = arith.constant 0 : i32
    %c0_i32_1 = arith.constant 0 : i32
    return %c0_i32, %c0_i32_0 : i32, i32
  }
  func.func @transform_1(%arg0: i32) -> (i32, i32) {
    %c0_i32 = arith.constant 0 : i32
    %c0_i32_0 = arith.constant 0 : i32
    return %arg0, %c0_i32 : i32, i32
  }
  func.func @transform_2(%arg0: i32) -> (i32, i32) {
    %c0_i32 = arith.constant 0 : i32
    %c0_i32_0 = arith.constant 0 : i32
    return %arg0, %c0_i32 : i32, i32
  }
  func.func @transform_3(%arg0: i32) -> (i32, i32) {
    %c0_i32 = arith.constant 0 : i32
    %c0_i32_0 = arith.constant 0 : i32
    return %arg0, %c0_i32 : i32, i32
  }
  func.func @transform_4(%arg0: i32) -> (i32, i32) {
    %c0_i32 = arith.constant 0 : i32
    %c0_i32_0 = arith.constant 0 : i32
    %c0_i32_1 = arith.constant 0 : i32
    return %c0_i32, %c0_i32_0 : i32, i32
  }
  func.func @transform_5(%arg0: i32) -> (i32, i32) {
    %c0_i32 = arith.constant 0 : i32
    %c0_i32_0 = arith.constant 0 : i32
    %c0_i32_1 = arith.constant 0 : i32
    return %c0_i32, %c0_i32_0 : i32, i32
  }
  func.func @transform_6(%arg0: i32) -> (i32, i32) {
    %c0_i32 = arith.constant 0 : i32
    %c0_i32_0 = arith.constant 0 : i32
    %c0_i32_1 = arith.constant 0 : i32
    return %c0_i32, %c0_i32_0 : i32, i32
  }
  func.func @transform_7(%arg0: i32) -> (i32, i32) {
    %c0_i32 = arith.constant 0 : i32
    %c0_i32_0 = arith.constant 0 : i32
    %c0_i32_1 = arith.constant 0 : i32
    return %c0_i32, %c0_i32_0 : i32, i32
  }
  func.func @transform_8(%arg0: i32) -> (i32, i32) {
    %c0_i32 = arith.constant 0 : i32
    %c0_i32_0 = arith.constant 0 : i32
    %c0_i32_1 = arith.constant 0 : i32
    return %c0_i32, %c0_i32_0 : i32, i32
  }
  func.func @transform_9(%arg0: i32) -> (i32, i32) {
    %c0_i32 = arith.constant 0 : i32
    %c0_i32_0 = arith.constant 0 : i32
    %c0_i32_1 = arith.constant 0 : i32
    return %c0_i32, %c0_i32_0 : i32, i32
  }
  func.func @transform_10(%arg0: i32) -> (i32, i32) {
    %c0_i32 = arith.constant 0 : i32
    %c0_i32_0 = arith.constant 0 : i32
    %c0_i32_1 = arith.constant 0 : i32
    return %c0_i32, %c0_i32_0 : i32, i32
  }
  func.func @transform_11(%arg0: i32) -> (i32, i32) {
    %c0_i32 = arith.constant 0 : i32
    %c0_i32_0 = arith.constant 0 : i32
    %c0_i32_1 = arith.constant 0 : i32
    return %c0_i32, %c0_i32_0 : i32, i32
  }
  func.func @transform_12(%arg0: i32) -> (i32, i32) {
    %c0_i32 = arith.constant 0 : i32
    %c0_i32_0 = arith.constant 0 : i32
    %c0_i32_1 = arith.constant 0 : i32
    return %c0_i32, %c0_i32_0 : i32, i32
  }
  func.func @transform_13(%arg0: i32) -> (i32, i32) {
    %c0_i32 = arith.constant 0 : i32
    %c0_i32_0 = arith.constant 0 : i32
    %c0_i32_1 = arith.constant 0 : i32
    return %c0_i32, %c0_i32_0 : i32, i32
  }
  func.func @transform_14(%arg0: i32) -> (i32, i32) {
    %c0_i32 = arith.constant 0 : i32
    %c0_i32_0 = arith.constant 0 : i32
    %c0_i32_1 = arith.constant 0 : i32
    return %c0_i32, %c0_i32_0 : i32, i32
  }
  func.func @transform_15(%arg0: i32) -> (i32, i32) {
    %c0_i32 = arith.constant 0 : i32
    %c0_i32_0 = arith.constant 0 : i32
    %c0_i32_1 = arith.constant 0 : i32
    return %c0_i32, %c0_i32_0 : i32, i32
  }
  func.func @transform_16(%arg0: i32) -> (i32, i32) {
    %c0_i32 = arith.constant 0 : i32
    %c0_i32_0 = arith.constant 0 : i32
    %c0_i32_1 = arith.constant 0 : i32
    return %c0_i32, %c0_i32_0 : i32, i32
  }
  func.func @transform_17(%arg0: i32) -> (i32, i32) {
    %c0_i32 = arith.constant 0 : i32
    %c0_i32_0 = arith.constant 0 : i32
    %c0_i32_1 = arith.constant 0 : i32
    return %c0_i32, %c0_i32_0 : i32, i32
  }
  func.func @transform_18(%arg0: i32) -> (i32, i32) {
    %c0_i32 = arith.constant 0 : i32
    %c0_i32_0 = arith.constant 0 : i32
    %c0_i32_1 = arith.constant 0 : i32
    return %c0_i32, %c0_i32_0 : i32, i32
  }
  func.func @transform_19(%arg0: i32) -> (i32, i32) {
    %c0_i32 = arith.constant 0 : i32
    %c0_i32_0 = arith.constant 0 : i32
    %c0_i32_1 = arith.constant 0 : i32
    return %c0_i32, %c0_i32_0 : i32, i32
  }
  func.func @transform_20(%arg0: i32) -> (i32, i32) {
    %c0_i32 = arith.constant 0 : i32
    %c0_i32_0 = arith.constant 0 : i32
    %c0_i32_1 = arith.constant 0 : i32
    return %c0_i32, %c0_i32_0 : i32, i32
  }
  func.func @transform_21(%arg0: i32) -> (i32, i32) {
    %c0_i32 = arith.constant 0 : i32
    %c0_i32_0 = arith.constant 0 : i32
    %c0_i32_1 = arith.constant 0 : i32
    return %c0_i32, %c0_i32_0 : i32, i32
  }
  func.func @transform_22(%arg0: i32) -> (i32, i32) {
    %c0_i32 = arith.constant 0 : i32
    %c0_i32_0 = arith.constant 0 : i32
    %c0_i32_1 = arith.constant 0 : i32
    return %c0_i32, %c0_i32_0 : i32, i32
  }
  func.func @transform_23(%arg0: i32) -> (i32, i32) {
    %c0_i32 = arith.constant 0 : i32
    %c0_i32_0 = arith.constant 0 : i32
    %c0_i32_1 = arith.constant 0 : i32
    return %c0_i32, %c0_i32_0 : i32, i32
  }
  func.func @transform_24(%arg0: i32) -> (i32, i32) {
    %c0_i32 = arith.constant 0 : i32
    %c0_i32_0 = arith.constant 0 : i32
    %c0_i32_1 = arith.constant 0 : i32
    return %c0_i32, %c0_i32_0 : i32, i32
  }
  func.func @transform_25(%arg0: i32) -> (i32, i32) {
    %c0_i32 = arith.constant 0 : i32
    %c0_i32_0 = arith.constant 0 : i32
    %c0_i32_1 = arith.constant 0 : i32
    return %c0_i32, %c0_i32_0 : i32, i32
  }
  func.func @transform_26(%arg0: i32) -> (i32, i32) {
    %c0_i32 = arith.constant 0 : i32
    %c0_i32_0 = arith.constant 0 : i32
    %c0_i32_1 = arith.constant 0 : i32
    return %c0_i32, %c0_i32_0 : i32, i32
  }
  func.func @transform_27(%arg0: i32) -> (i32, i32) {
    %c0_i32 = arith.constant 0 : i32
    %c0_i32_0 = arith.constant 0 : i32
    %c0_i32_1 = arith.constant 0 : i32
    return %c0_i32, %c0_i32_0 : i32, i32
  }
  func.func @transform_28(%arg0: i32) -> (i32, i32) {
    %c0_i32 = arith.constant 0 : i32
    %c0_i32_0 = arith.constant 0 : i32
    %c0_i32_1 = arith.constant 0 : i32
    return %c0_i32, %c0_i32_0 : i32, i32
  }
  func.func @transform_29(%arg0: i32) -> (i32, i32) {
    %c0_i32 = arith.constant 0 : i32
    %c0_i32_0 = arith.constant 0 : i32
    %c0_i32_1 = arith.constant 0 : i32
    return %c0_i32, %c0_i32_0 : i32, i32
  }
  func.func @transform_30(%arg0: i32) -> (i32, i32) {
    %c0_i32 = arith.constant 0 : i32
    %c0_i32_0 = arith.constant 0 : i32
    %c0_i32_1 = arith.constant 0 : i32
    return %c0_i32, %c0_i32_0 : i32, i32
  }
  func.func @transform_31(%arg0: i32) -> (i32, i32) {
    %c0_i32 = arith.constant 0 : i32
    %c0_i32_0 = arith.constant 0 : i32
    %c0_i32_1 = arith.constant 0 : i32
    return %c0_i32, %c0_i32_0 : i32, i32
  }
  func.func @transform_32(%arg0: i32) -> (i32, i32) {
    %c0_i32 = arith.constant 0 : i32
    %c0_i32_0 = arith.constant 0 : i32
    %c0_i32_1 = arith.constant 0 : i32
    return %c0_i32, %c0_i32_0 : i32, i32
  }
  func.func @transform_33(%arg0: i32) -> (i32, i32) {
    %c0_i32 = arith.constant 0 : i32
    %c0_i32_0 = arith.constant 0 : i32
    return %arg0, %c0_i32 : i32, i32
  }
}

</mosaic_0001>

<llo_original>
// kernel: tpu_custom_call.1
$region0: #{tpu_custom_call.1}
  #allocation0 [shape = 'u32[]', space=smem, size = 0x4, offset = 0x4, fixed_abs, tag = 'smem constant byte address 0x4 - core index']
  #allocation1 [shape = 'u32[72,128]{1,0:T(1,128)}', space=vmem, size = 0x9000, scoped, tag = 'internal scratch']
  #allocation2 [shape = 'bf16[16,32]{1,0:T(8,128)(2,1)}', space=vmem, size = 0x1000, scoped, tag = 'scratch operand']
  #allocation3 [shape = 'bf16[16,32]{1,0:T(8,128)(2,1)}', space=vmem, size = 0x1000, scoped, tag = 'scratch operand']
  #allocation4 [shape = 'bf16[16,32]{1,0:T(8,128)(2,1)}', space=vmem, size = 0x1000, scoped, tag = 'scratch operand']
  #allocation5 [shape = 'f32[16,64]{1,0:T(8,128)}', space=vmem, size = 0x2000, scoped, tag = 'scratch operand']
  %s0 = inlined_call_operand.smem [shape: u32[34], index: -1, kind: input, shape index: {}]
  %s1 = sld [smem:[%s0]]
  %s2 = scalar_lea.smem %s0, 1
  %s3 = sld [smem:[%s2]]
  %s4 = scalar_lea.smem %s0, 2
  %s5 = sld [smem:[%s4]]
  %s6 = scalar_lea.smem %s0, 3
  %s7 = sld [smem:[%s6]]
  %s8 = scalar_lea.smem %s0, 4
  %s9 = sld [smem:[%s8]]
  %s10 = scalar_lea.smem %s0, 5
  %s11 = sld [smem:[%s10]]
  %s12 = scalar_lea.smem %s0, 6
  %s13 = sld [smem:[%s12]]
  %s14 = scalar_lea.smem %s0, 7
  %s15 = sld [smem:[%s14]]
  %s16 = scalar_lea.smem %s0, 8
  %s17 = sld [smem:[%s16]]
  %s18 = scalar_lea.smem %s0, 9
  %s19 = sld [smem:[%s18]]
  %s20 = scalar_lea.smem %s0, 10
  %s21 = sld [smem:[%s20]]
  %s22 = scalar_lea.smem %s0, 11
  %s23 = sld [smem:[%s22]]
  %s24 = scalar_lea.smem %s0, 12
  %s25 = sld [smem:[%s24]]
  %s26 = scalar_lea.smem %s0, 13
  %s27 = sld [smem:[%s26]]
  %s28 = scalar_lea.smem %s0, 14
  %s29 = sld [smem:[%s28]]
  %s30 = scalar_lea.smem %s0, 15
  %s31 = sld [smem:[%s30]]
  %s32 = scalar_lea.smem %s0, 16
  %s33 = sld [smem:[%s32]]
  %s34 = scalar_lea.smem %s0, 17
  %s35 = sld [smem:[%s34]]
  %s36 = scalar_lea.smem %s0, 18
  %s37 = sld [smem:[%s36]]
  %s38 = scalar_lea.smem %s0, 19
  %s39 = sld [smem:[%s38]]
  %s40 = scalar_lea.smem %s0, 20
  %s41 = sld [smem:[%s40]]
  %s42 = scalar_lea.smem %s0, 21
  %s43 = sld [smem:[%s42]]
  %s44 = scalar_lea.smem %s0, 22
  %s45 = sld [smem:[%s44]]
  %s46 = scalar_lea.smem %s0, 23
  %s47 = sld [smem:[%s46]]
  %s48 = scalar_lea.smem %s0, 24
  %s49 = sld [smem:[%s48]]
  %s50 = scalar_lea.smem %s0, 25
  %s51 = sld [smem:[%s50]]
  %s52 = scalar_lea.smem %s0, 26
  %s53 = sld [smem:[%s52]]
  %s54 = scalar_lea.smem %s0, 27
  %s55 = sld [smem:[%s54]]
  %s56 = scalar_lea.smem %s0, 28
  %s57 = sld [smem:[%s56]]
  %s58 = scalar_lea.smem %s0, 29
  %s59 = sld [smem:[%s58]]
  %s60 = scalar_lea.smem %s0, 30
  %s61 = sld [smem:[%s60]]
  %s62 = scalar_lea.smem %s0, 31
  %s63 = sld [smem:[%s62]]
  %s64 = scalar_lea.smem %s0, 32
  %s65 = sld [smem:[%s64]]
  %s66 = scalar_lea.smem %s0, 33
  %s67 = sld [smem:[%s66]]
  %68 = xla_tuple %s65, %s67
  %s69 = sld [smem:[#allocation0]]
  $region154: #{tpu_custom_call.1} parent=0
    _
  %s71 = ssub.s32 1, %s69
  %s72 = scalar_select 0, %s71, %s69
  $region1: #{tpu_custom_call.1} parent=0
    #allocation6 [shape = 'u8[8192]{0}', space=vmem, size = 0x2000, scoped, tag = 'output window, operand 0, single buffered']
    #allocation7 [shape = 's32[1]{0}', space=sflag, size = 0x4, scoped, tag = 'scoped memory for tpu_custom_call.1']
    %73 = vsyncpa [#allocation7], 0
    // Predicated region
    $region2: #{tpu_custom_call.1} parent=1 // pred_check
      _
    $region3: #{tpu_custom_call.1} parent=1 // pred_check_branch
      %75 = sbr.rel (0) target = $region5
    $region4: #{tpu_custom_call.1} parent=1 // pred_region
      _
    $region5: #{tpu_custom_call.1} parent=1 // pred_fallthru
      _
    // Predicated region
    $region6: #{tpu_custom_call.1} parent=1 // pred_check
      _
    $region7: #{tpu_custom_call.1} parent=1 // pred_check_branch
      %77 = sbr.rel (0) target = $region9
    $region8: #{tpu_custom_call.1} parent=1 // pred_region
      _
    $region9: #{tpu_custom_call.1} parent=1 // pred_fallthru
      _
    // Predicated region
    $region10: #{tpu_custom_call.1} parent=1 // pred_check
      _
    $region11: #{tpu_custom_call.1} parent=1 // pred_check_branch
      %79 = sbr.rel (0) target = $region13
    $region12: #{tpu_custom_call.1} parent=1 // pred_region
      _
    $region13: #{tpu_custom_call.1} parent=1 // pred_fallthru
      _
    // Predicated region
    $region14: #{tpu_custom_call.1} parent=1 // pred_check
      _
    $region15: #{tpu_custom_call.1} parent=1 // pred_check_branch
      %81 = sbr.rel (0) target = $region17
    $region16: #{tpu_custom_call.1} parent=1 // pred_region
      _
    $region17: #{tpu_custom_call.1} parent=1 // pred_fallthru
      _
    // Predicated region
    $region18: #{tpu_custom_call.1} parent=1 // pred_check
      _
    $region19: #{tpu_custom_call.1} parent=1 // pred_check_branch
      %83 = sbr.rel (0) target = $region21
    $region20: #{tpu_custom_call.1} parent=1 // pred_region
      _
    $region21: #{tpu_custom_call.1} parent=1 // pred_fallthru
      _
    // Predicated region
    $region22: #{tpu_custom_call.1} parent=1 // pred_check
      _
    $region23: #{tpu_custom_call.1} parent=1 // pred_check_branch
      %85 = sbr.rel (0) target = $region25
    $region24: #{tpu_custom_call.1} parent=1 // pred_region
      _
    $region25: #{tpu_custom_call.1} parent=1 // pred_fallthru
      _
    // Predicated region
    $region26: #{tpu_custom_call.1} parent=1 // pred_check
      _
    $region27: #{tpu_custom_call.1} parent=1 // pred_check_branch
      %87 = sbr.rel (0) target = $region29
    $region28: #{tpu_custom_call.1} parent=1 // pred_region
      _
    $region29: #{tpu_custom_call.1} parent=1 // pred_fallthru
      _
    // Predicated region
    $region30: #{tpu_custom_call.1} parent=1 // pred_check
      _
    $region31: #{tpu_custom_call.1} parent=1 // pred_check_branch
      %89 = sbr.rel (0) target = $region33
    $region32: #{tpu_custom_call.1} parent=1 // pred_region
      _
    $region33: #{tpu_custom_call.1} parent=1 // pred_fallthru
      _
    // Predicated region
    $region34: #{tpu_custom_call.1} parent=1 // pred_check
      _
    $region35: #{tpu_custom_call.1} parent=1 // pred_check_branch
      %91 = sbr.rel (0) target = $region37
    $region36: #{tpu_custom_call.1} parent=1 // pred_region
      _
    $region37: #{tpu_custom_call.1} parent=1 // pred_fallthru
      _
    // Predicated region
    $region38: #{tpu_custom_call.1} parent=1 // pred_check
      _
    $region39: #{tpu_custom_call.1} parent=1 // pred_check_branch
      %93 = sbr.rel (0) target = $region41
    $region40: #{tpu_custom_call.1} parent=1 // pred_region
      _
    $region41: #{tpu_custom_call.1} parent=1 // pred_fallthru
      _
    // Predicated region
    $region42: #{tpu_custom_call.1} parent=1 // pred_check
      _
    $region43: #{tpu_custom_call.1} parent=1 // pred_check_branch
      %95 = sbr.rel (0) target = $region45
    $region44: #{tpu_custom_call.1} parent=1 // pred_region
      _
    $region45: #{tpu_custom_call.1} parent=1 // pred_fallthru
      _
    // Predicated region
    $region46: #{tpu_custom_call.1} parent=1 // pred_check
      _
    $region47: #{tpu_custom_call.1} parent=1 // pred_check_branch
      %97 = sbr.rel (0) target = $region49
    $region48: #{tpu_custom_call.1} parent=1 // pred_region
      _
    $region49: #{tpu_custom_call.1} parent=1 // pred_fallthru
      _
    // Predicated region
    $region50: #{tpu_custom_call.1} parent=1 // pred_check
      _
    $region51: #{tpu_custom_call.1} parent=1 // pred_check_branch
      %99 = sbr.rel (0) target = $region53
    $region52: #{tpu_custom_call.1} parent=1 // pred_region
      _
    $region53: #{tpu_custom_call.1} parent=1 // pred_fallthru
      _
    // Predicated region
    $region54: #{tpu_custom_call.1} parent=1 // pred_check
      _
    $region55: #{tpu_custom_call.1} parent=1 // pred_check_branch
      %101 = sbr.rel (0) target = $region57
    $region56: #{tpu_custom_call.1} parent=1 // pred_region
      _
    $region57: #{tpu_custom_call.1} parent=1 // pred_fallthru
      _
    // Predicated region
    $region58: #{tpu_custom_call.1} parent=1 // pred_check
      _
    $region59: #{tpu_custom_call.1} parent=1 // pred_check_branch
      %103 = sbr.rel (0) target = $region61
    $region60: #{tpu_custom_call.1} parent=1 // pred_region
      _
    $region61: #{tpu_custom_call.1} parent=1 // pred_fallthru
      _
    // Predicated region
    $region62: #{tpu_custom_call.1} parent=1 // pred_check
      _
    $region63: #{tpu_custom_call.1} parent=1 // pred_check_branch
      %105 = sbr.rel (0) target = $region65
    $region64: #{tpu_custom_call.1} parent=1 // pred_region
      _
    $region65: #{tpu_custom_call.1} parent=1 // pred_fallthru
      _
    // Predicated region
    $region66: #{tpu_custom_call.1} parent=1 // pred_check
      _
    $region67: #{tpu_custom_call.1} parent=1 // pred_check_branch
      %107 = sbr.rel (0) target = $region69
    $region68: #{tpu_custom_call.1} parent=1 // pred_region
      _
    $region69: #{tpu_custom_call.1} parent=1 // pred_fallthru
      _
    // Predicated region
    $region70: #{tpu_custom_call.1} parent=1 // pred_check
      _
    $region71: #{tpu_custom_call.1} parent=1 // pred_check_branch
      %109 = sbr.rel (0) target = $region73
    $region72: #{tpu_custom_call.1} parent=1 // pred_region
      _
    $region73: #{tpu_custom_call.1} parent=1 // pred_fallthru
      _
    // Predicated region
    $region74: #{tpu_custom_call.1} parent=1 // pred_check
      _
    $region75: #{tpu_custom_call.1} parent=1 // pred_check_branch
      %111 = sbr.rel (0) target = $region77
    $region76: #{tpu_custom_call.1} parent=1 // pred_region
      _
    $region77: #{tpu_custom_call.1} parent=1 // pred_fallthru
      _
    // Predicated region
    $region78: #{tpu_custom_call.1} parent=1 // pred_check
      _
    $region79: #{tpu_custom_call.1} parent=1 // pred_check_branch
      %113 = sbr.rel (0) target = $region81
    $region80: #{tpu_custom_call.1} parent=1 // pred_region
      _
    $region81: #{tpu_custom_call.1} parent=1 // pred_fallthru
      _
    // Predicated region
    $region82: #{tpu_custom_call.1} parent=1 // pred_check
      _
    $region83: #{tpu_custom_call.1} parent=1 // pred_check_branch
      %115 = sbr.rel (0) target = $region85
    $region84: #{tpu_custom_call.1} parent=1 // pred_region
      _
    $region85: #{tpu_custom_call.1} parent=1 // pred_fallthru
      _
    // Predicated region
    $region86: #{tpu_custom_call.1} parent=1 // pred_check
      _
    $region87: #{tpu_custom_call.1} parent=1 // pred_check_branch
      %117 = sbr.rel (0) target = $region89
    $region88: #{tpu_custom_call.1} parent=1 // pred_region
      _
    $region89: #{tpu_custom_call.1} parent=1 // pred_fallthru
      _
    // Predicated region
    $region90: #{tpu_custom_call.1} parent=1 // pred_check
      _
    $region91: #{tpu_custom_call.1} parent=1 // pred_check_branch
      %119 = sbr.rel (0) target = $region93
    $region92: #{tpu_custom_call.1} parent=1 // pred_region
      _
    $region93: #{tpu_custom_call.1} parent=1 // pred_fallthru
      _
    // Predicated region
    $region94: #{tpu_custom_call.1} parent=1 // pred_check
      _
    $region95: #{tpu_custom_call.1} parent=1 // pred_check_branch
      %121 = sbr.rel (0) target = $region97
    $region96: #{tpu_custom_call.1} parent=1 // pred_region
      _
    $region97: #{tpu_custom_call.1} parent=1 // pred_fallthru
      _
    // Predicated region
    $region98: #{tpu_custom_call.1} parent=1 // pred_check
      _
    $region99: #{tpu_custom_call.1} parent=1 // pred_check_branch
      %123 = sbr.rel (0) target = $region101
    $region100: #{tpu_custom_call.1} parent=1 // pred_region
      _
    $region101: #{tpu_custom_call.1} parent=1 // pred_fallthru
      _
    // Predicated region
    $region102: #{tpu_custom_call.1} parent=1 // pred_check
      _
    $region103: #{tpu_custom_call.1} parent=1 // pred_check_branch
      %125 = sbr.rel (0) target = $region105
    $region104: #{tpu_custom_call.1} parent=1 // pred_region
      _
    $region105: #{tpu_custom_call.1} parent=1 // pred_fallthru
      _
    // Predicated region
    $region106: #{tpu_custom_call.1} parent=1 // pred_check
      _
    $region107: #{tpu_custom_call.1} parent=1 // pred_check_branch
      %127 = sbr.rel (0) target = $region109
    $region108: #{tpu_custom_call.1} parent=1 // pred_region
      _
    $region109: #{tpu_custom_call.1} parent=1 // pred_fallthru
      _
    // Predicated region
    $region110: #{tpu_custom_call.1} parent=1 // pred_check
      _
    $region111: #{tpu_custom_call.1} parent=1 // pred_check_branch
      %129 = sbr.rel (0) target = $region113
    $region112: #{tpu_custom_call.1} parent=1 // pred_region
      _
    $region113: #{tpu_custom_call.1} parent=1 // pred_fallthru
      _
    // Predicated region
    $region114: #{tpu_custom_call.1} parent=1 // pred_check
      _
    $region115: #{tpu_custom_call.1} parent=1 // pred_check_branch
      %131 = sbr.rel (0) target = $region117
    $region116: #{tpu_custom_call.1} parent=1 // pred_region
      _
    $region117: #{tpu_custom_call.1} parent=1 // pred_fallthru
      _
    // Predicated region
    $region118: #{tpu_custom_call.1} parent=1 // pred_check
      _
    $region119: #{tpu_custom_call.1} parent=1 // pred_check_branch
      %133 = sbr.rel (0) target = $region121
    $region120: #{tpu_custom_call.1} parent=1 // pred_region
      _
    $region121: #{tpu_custom_call.1} parent=1 // pred_fallthru
      _
    // Predicated region
    $region122: #{tpu_custom_call.1} parent=1 // pred_check
      _
    $region123: #{tpu_custom_call.1} parent=1 // pred_check_branch
      %135 = sbr.rel (0) target = $region125
    $region124: #{tpu_custom_call.1} parent=1 // pred_region
      _
    $region125: #{tpu_custom_call.1} parent=1 // pred_fallthru
      _
    // Predicated region
    $region126: #{tpu_custom_call.1} parent=1 // pred_check
      _
    $region127: #{tpu_custom_call.1} parent=1 // pred_check_branch
      %137 = sbr.rel (0) target = $region129
    $region128: #{tpu_custom_call.1} parent=1 // pred_region
      _
    $region129: #{tpu_custom_call.1} parent=1 // pred_fallthru
      _
    %p139 = scmp.eq.s32.totalorder 0, 0
    // Predicated region
    $region130: #{tpu_custom_call.1} parent=1 // pred_check
      %p140 = pneg %p139
    $region131: #{tpu_custom_call.1} parent=1 // pred_check_branch
      %142 = sbr.rel (%p140) target = $region133
    $region132: #{tpu_custom_call.1} parent=1 // pred_region
      %v143 = vld [vmem:[%s1] sm:$0xff]
      %v144 = vld [vmem:[%s1 + $0x8] sm:$0xff]
      %v145 = vpack.c.bf16 %v144, %v143
      %v146 = vld [vmem:[%s9] sm:$0xf]
      %v147 = vld [vmem:[%s9 + $0x4] sm:$0xf]
      %v148 = vld [vmem:[%s9 + $0x8] sm:$0xf]
      %v149 = vld [vmem:[%s9 + $0xc] sm:$0xf]
      %v150 = vld [vmem:[%s11] sm:$0x1]
      %v152 = vperm.slane %v150, 0
      %v158 = vunpack.c.l.b16 %v146
      %v159 = vunpack.c.l.b16 %v147
      %v160 = vunpack.c.l.b16 %v148
      %v161 = vunpack.c.l.b16 %v149
      %v162 = vpack.c.b16 %v159, %v158
      %v163 = vpack.c.b16 %v161, %v160
      %vm166 = vcmask 261120
      %v168 = vsel %vm166, %v145, 0
      %170 = vmatpush.bf16.msra.mxu0 0
      %171 = vmatpush.bf16.msra.mxu0 0
      %172 = vmatpush.bf16.msra.mxu0 0
      %173 = vmatpush.bf16.msra.mxu0 0
      %174 = vmatpush.bf16.msra.mxu0 0
      %175 = vmatpush.bf16.msra.mxu0 0
      %176 = vmatpush.bf16.msra.mxu0 %v163
      %177 = vmatpush.bf16.msra.mxu0 %v162
      %178 = vmatmul.bf16.gmra.mxu0 %v168
      %v179 = vpop.f32.mrf.mxu0
      %v180 = vadd.f32 %v152, %v179
      %v181 = vpop.f32.mrf.mxu0
      %v182 = vadd.f32 %v152, %v181
      %183 = vdwg.mxu0
      %v184 = vpack.c.bf16 %v180, %v180
      %v185 = vpack.c.bf16 %v182, %v182
      %vm186 = vcmask 257024
      %187 = vst.msk [vmem:[#allocation2] sm:$0xf] %vm186, %v184
      %188 = vst.msk [vmem:[#allocation2 + $0x4] sm:$0xf] %vm186, %v185
      %v189 = vld [vmem:[%s13] sm:$0xf]
      %v190 = vld [vmem:[%s13 + $0x4] sm:$0xf]
      %v191 = vld [vmem:[%s13 + $0x8] sm:$0xf]
      %v192 = vld [vmem:[%s13 + $0xc] sm:$0xf]
      %v197 = vunpack.c.l.b16 %v189
      %v198 = vunpack.c.l.b16 %v190
      %v199 = vunpack.c.l.b16 %v191
      %v200 = vunpack.c.l.b16 %v192
      %v201 = vpack.c.b16 %v198, %v197
      %v202 = vpack.c.b16 %v200, %v199
      %205 = vmatpush.bf16.msra.mxu0 0
      %206 = vmatpush.bf16.msra.mxu0 0
      %207 = vmatpush.bf16.msra.mxu0 0
      %208 = vmatpush.bf16.msra.mxu0 0
      %209 = vmatpush.bf16.msra.mxu0 0
      %210 = vmatpush.bf16.msra.mxu0 0
      %211 = vmatpush.bf16.msra.mxu0 %v202
      %212 = vmatpush.bf16.msra.mxu0 %v201
      %213 = vmatmul.bf16.gmra.mxu0 %v168
      %v214 = vpop.f32.mrf.mxu0
      %v215 = vadd.f32 0.0, %v214
      %v216 = vpop.f32.mrf.mxu0
      %v217 = vadd.f32 0.0, %v216
      %218 = vdwg.mxu0
      %v219 = vpack.c.bf16 %v215, %v215
      %v220 = vpack.c.bf16 %v217, %v217
      %221 = vst.msk [vmem:[#allocation3] sm:$0xf] %vm186, %v219
      %222 = vst.msk [vmem:[#allocation3 + $0x4] sm:$0xf] %vm186, %v220
      %v223 = vld [vmem:[%s15] sm:$0xf]
      %v224 = vld [vmem:[%s15 + $0x4] sm:$0xf]
      %v225 = vld [vmem:[%s15 + $0x8] sm:$0xf]
      %v226 = vld [vmem:[%s15 + $0xc] sm:$0xf]
      %v231 = vunpack.c.l.b16 %v223
      %v232 = vunpack.c.l.b16 %v224
      %v233 = vunpack.c.l.b16 %v225
      %v234 = vunpack.c.l.b16 %v226
      %v235 = vpack.c.b16 %v232, %v231
      %v236 = vpack.c.b16 %v234, %v233
      %239 = vmatpush.bf16.msra.mxu0 0
      %240 = vmatpush.bf16.msra.mxu0 0
      %241 = vmatpush.bf16.msra.mxu0 0
      %242 = vmatpush.bf16.msra.mxu0 0
      %243 = vmatpush.bf16.msra.mxu0 0
      %244 = vmatpush.bf16.msra.mxu0 0
      %245 = vmatpush.bf16.msra.mxu0 %v236
      %246 = vmatpush.bf16.msra.mxu0 %v235
      %247 = vmatmul.bf16.gmra.mxu0 %v168
      %v248 = vpop.f32.mrf.mxu0
      %v249 = vadd.f32 0.0, %v248
      %v250 = vpop.f32.mrf.mxu0
      %v251 = vadd.f32 0.0, %v250
      %252 = vdwg.mxu0
      %v253 = vpack.c.bf16 %v249, %v249
      %v254 = vpack.c.bf16 %v251, %v251
      %255 = vst.msk [vmem:[#allocation4] sm:$0xf] %vm186, %v253
      %256 = vst.msk [vmem:[#allocation4 + $0x4] sm:$0xf] %vm186, %v254
      %vm257 = vcmask 523264
      %258 = vst.msk [vmem:[#allocation5] sm:$0xff] %vm257, 0.0
      %259 = vst.msk [vmem:[#allocation5 + $0x8] sm:$0xff] %vm257, 0.0
    $region133: #{tpu_custom_call.1} parent=1 // pred_fallthru
      _
    %v260 = vld [vmem:[%s5] sm:$0xf]
    %v261 = vld [vmem:[%s5 + $0x4] sm:$0xf]
    %v262 = vld [vmem:[%s5 + $0x8] sm:$0xf]
    %v263 = vld [vmem:[%s5 + $0xc] sm:$0xf]
    %v264 = vld [vmem:[%s5 + $0x10] sm:$0xf]
    %v265 = vld [vmem:[%s5 + $0x14] sm:$0xf]
    %v266 = vld [vmem:[%s5 + $0x18] sm:$0xf]
    %v267 = vld [vmem:[%s5 + $0x1c] sm:$0xf]
    %v268 = vld [vmem:[%s7] sm:$0xf]
    %v269 = vld [vmem:[%s7 + $0x4] sm:$0xf]
    %v270 = vld [vmem:[%s7 + $0x8] sm:$0xf]
    %v271 = vld [vmem:[%s7 + $0xc] sm:$0xf]
    %v272 = vld [vmem:[%s7 + $0x10] sm:$0xf]
    %v273 = vld [vmem:[%s7 + $0x14] sm:$0xf]
    %v274 = vld [vmem:[%s7 + $0x18] sm:$0xf]
    %v275 = vld [vmem:[%s7 + $0x1c] sm:$0xf]
    %v276 = vld [vmem:[%s3] sm:$0xff]
    %v277 = vld [vmem:[%s3 + $0x8] sm:$0xff]
    %v278 = vld [vmem:[%s3 + $0x10] sm:$0xff]
    %v279 = vld [vmem:[%s3 + $0x18] sm:$0xff]
    %v280 = vld [vmem:[%s3 + $0x20] sm:$0xff]
    %v281 = vld [vmem:[%s3 + $0x28] sm:$0xff]
    %v282 = vld [vmem:[%s3 + $0x30] sm:$0xff]
    %v283 = vld [vmem:[%s3 + $0x38] sm:$0xff]
    %v284 = vpack.c.bf16 %v277, %v276
    %v285 = vpack.c.bf16 %v279, %v278
    %v286 = vpack.c.bf16 %v281, %v280
    %v287 = vpack.c.bf16 %v283, %v282
    %v288 = vld [vmem:[#allocation3] sm:$0xf]
    %v289 = vld [vmem:[#allocation3 + $0x4] sm:$0xf]
    %v290 = vld [vmem:[#allocation2] sm:$0xf]
    %v291 = vld [vmem:[#allocation2 + $0x4] sm:$0xf]
    %v300 = vunpack.c.l.b16 %v268
    %v301 = vunpack.c.l.b16 %v269
    %v302 = vunpack.c.l.b16 %v270
    %v303 = vunpack.c.l.b16 %v271
    %v304 = vunpack.c.l.b16 %v272
    %v305 = vunpack.c.l.b16 %v273
    %v306 = vunpack.c.l.b16 %v274
    %v307 = vunpack.c.l.b16 %v275
    %v308 = vpack.c.b16 %v301, %v300
    %v309 = vpack.c.b16 %v303, %v302
    %v310 = vpack.c.b16 %v305, %v304
    %v311 = vpack.c.b16 %v307, %v306
    %v314 = vunpack.c.l.b16 %v290
    %v315 = vunpack.c.l.b16 %v291
    %v316 = vpack.c.b16 %v315, %v314
    %vm318 = vcmask 130048
    %v320 = vsel %vm318, %v308, 0
    %v323 = vsel %vm318, %v309, 0
    %v326 = vsel %vm318, %v310, 0
    %v329 = vsel %vm318, %v311, 0
    %331 = vmatpush.bf16.msra.mxu0 0
    %332 = vmatpush.bf16.msra.mxu0 0
    %333 = vmatpush.bf16.msra.mxu0 0
    %334 = vmatpush.bf16.msra.mxu0 0
    %335 = vmatpush.bf16.msra.mxu0 0
    %336 = vmatpush.bf16.msra.mxu0 0
    %337 = vmatpush.bf16.msra.mxu0 0
    %338 = vmatpush.bf16.msra.mxu0 %v316
    %339 = vmatmul.bf16.gmra.mxu0 %v320
    %v340 = vpop.f32.mrf.mxu0
    %v341 = vadd.f32 0.0, %v340
    %v342 = vpop.f32.mrf.mxu0
    %v343 = vadd.f32 0.0, %v342
    %344 = vmatmul.bf16.gmra.mxu0 %v323
    %v345 = vpop.f32.mrf.mxu0
    %v346 = vadd.f32 0.0, %v345
    %v347 = vpop.f32.mrf.mxu0
    %v348 = vadd.f32 0.0, %v347
    %349 = vmatmul.bf16.gmra.mxu0 %v326
    %v350 = vpop.f32.mrf.mxu0
    %v351 = vadd.f32 0.0, %v350
    %v352 = vpop.f32.mrf.mxu0
    %v353 = vadd.f32 0.0, %v352
    %354 = vmatmul.bf16.gmra.mxu0 %v329
    %v355 = vpop.f32.mrf.mxu0
    %v356 = vadd.f32 0.0, %v355
    %v357 = vpop.f32.mrf.mxu0
    %v358 = vadd.f32 0.0, %v357
    %359 = vdwg.mxu0
    %v360 = vld [vmem:[#allocation4] sm:$0xf]
    %v361 = vld [vmem:[#allocation4 + $0x4] sm:$0xf]
    %v370 = vunpack.c.l.b16 %v260
    %v371 = vunpack.c.l.b16 %v261
    %v372 = vunpack.c.l.b16 %v262
    %v373 = vunpack.c.l.b16 %v263
    %v374 = vunpack.c.l.b16 %v264
    %v375 = vunpack.c.l.b16 %v265
    %v376 = vunpack.c.l.b16 %v266
    %v377 = vunpack.c.l.b16 %v267
    %v378 = vpack.c.b16 %v371, %v370
    %v379 = vpack.c.b16 %v373, %v372
    %v380 = vpack.c.b16 %v375, %v374
    %v381 = vpack.c.b16 %v377, %v376
    %v384 = vunpack.c.l.b16 %v360
    %v385 = vunpack.c.l.b16 %v361
    %v386 = vpack.c.b16 %v385, %v384
    %v389 = vsel %vm318, %v378, 0
    %v392 = vsel %vm318, %v379, 0
    %v395 = vsel %vm318, %v380, 0
    %v398 = vsel %vm318, %v381, 0
    %400 = vmatpush.bf16.msra.mxu0 0
    %401 = vmatpush.bf16.msra.mxu0 0
    %402 = vmatpush.bf16.msra.mxu0 0
    %403 = vmatpush.bf16.msra.mxu0 0
    %404 = vmatpush.bf16.msra.mxu0 0
    %405 = vmatpush.bf16.msra.mxu0 0
    %406 = vmatpush.bf16.msra.mxu0 0
    %407 = vmatpush.bf16.msra.mxu0 %v386
    %408 = vmatmul.bf16.gmra.mxu0 %v389
    %v409 = vpop.f32.mrf.mxu0
    %v410 = vadd.f32 0.0, %v409
    %v411 = vpop.f32.mrf.mxu0
    %v412 = vadd.f32 0.0, %v411
    %413 = vmatmul.bf16.gmra.mxu0 %v392
    %v414 = vpop.f32.mrf.mxu0
    %v415 = vadd.f32 0.0, %v414
    %v416 = vpop.f32.mrf.mxu0
    %v417 = vadd.f32 0.0, %v416
    %418 = vmatmul.bf16.gmra.mxu0 %v395
    %v419 = vpop.f32.mrf.mxu0
    %v420 = vadd.f32 0.0, %v419
    %v421 = vpop.f32.mrf.mxu0
    %v422 = vadd.f32 0.0, %v421
    %423 = vmatmul.bf16.gmra.mxu0 %v398
    %v424 = vpop.f32.mrf.mxu0
    %v425 = vadd.f32 0.0, %v424
    %v426 = vpop.f32.mrf.mxu0
    %v427 = vadd.f32 0.0, %v426
    %428 = vdwg.mxu0
    %v429 = vld [vmem:[%s17] sm:$0xf]
    %v430 = vld [vmem:[%s17 + $0x4] sm:$0xf]
    %v431 = vld [vmem:[%s17 + $0x8] sm:$0xf]
    %v432 = vld [vmem:[%s17 + $0xc] sm:$0xf]
    %v433 = vld [vmem:[%s19] sm:$0x1]
    %v435 = vperm.slane %v433, 0
    %v441 = vunpack.c.l.b16 %v429
    %v442 = vunpack.c.l.b16 %v430
    %v443 = vunpack.c.l.b16 %v431
    %v444 = vunpack.c.l.b16 %v432
    %v445 = vpack.c.b16 %v442, %v441
    %v446 = vpack.c.b16 %v444, %v443
    %vm449 = vcmask 261120
    %v451 = vsel %vm449, %v284, 0
    %v454 = vsel %vm449, %v285, 0
    %v457 = vsel %vm449, %v286, 0
    %v460 = vsel %vm449, %v287, 0
    %462 = vmatpush.bf16.msra.mxu0 0
    %463 = vmatpush.bf16.msra.mxu0 0
    %464 = vmatpush.bf16.msra.mxu0 0
    %465 = vmatpush.bf16.msra.mxu0 0
    %466 = vmatpush.bf16.msra.mxu0 0
    %467 = vmatpush.bf16.msra.mxu0 0
    %468 = vmatpush.bf16.msra.mxu0 %v446
    %469 = vmatpush.bf16.msra.mxu0 %v445
    %470 = vmatmul.bf16.gmra.mxu0 %v451
    %v471 = vpop.f32.mrf.mxu0
    %v472 = vadd.f32 %v435, %v471
    %v473 = vpop.f32.mrf.mxu0
    %v474 = vadd.f32 %v435, %v473
    %475 = vmatmul.bf16.gmra.mxu0 %v454
    %v476 = vpop.f32.mrf.mxu0
    %v477 = vadd.f32 %v435, %v476
    %v478 = vpop.f32.mrf.mxu0
    %v479 = vadd.f32 %v435, %v478
    %480 = vmatmul.bf16.gmra.mxu0 %v457
    %v481 = vpop.f32.mrf.mxu0
    %v482 = vadd.f32 %v435, %v481
    %v483 = vpop.f32.mrf.mxu0
    %v484 = vadd.f32 %v435, %v483
    %485 = vmatmul.bf16.gmra.mxu0 %v460
    %v486 = vpop.f32.mrf.mxu0
    %v487 = vadd.f32 %v435, %v486
    %v488 = vpop.f32.mrf.mxu0
    %v489 = vadd.f32 %v435, %v488
    %490 = vdwg.mxu0
    %v491 = vld [vmem:[%s21] sm:$0xf]
    %v492 = vld [vmem:[%s21 + $0x4] sm:$0xf]
    %v493 = vld [vmem:[%s21 + $0x8] sm:$0xf]
    %v494 = vld [vmem:[%s21 + $0xc] sm:$0xf]
    %v495 = vld [vmem:[%s23] sm:$0x1]
    %v497 = vperm.slane %v495, 0
    %v503 = vunpack.c.l.b16 %v491
    %v504 = vunpack.c.l.b16 %v492
    %v505 = vunpack.c.l.b16 %v493
    %v506 = vunpack.c.l.b16 %v494
    %v507 = vpack.c.b16 %v504, %v503
    %v508 = vpack.c.b16 %v506, %v505
    %511 = vmatpush.bf16.msra.mxu0 0
    %512 = vmatpush.bf16.msra.mxu0 0
    %513 = vmatpush.bf16.msra.mxu0 0
    %514 = vmatpush.bf16.msra.mxu0 0
    %515 = vmatpush.bf16.msra.mxu0 0
    %516 = vmatpush.bf16.msra.mxu0 0
    %517 = vmatpush.bf16.msra.mxu0 %v508
    %518 = vmatpush.bf16.msra.mxu0 %v507
    %519 = vmatmul.bf16.gmra.mxu0 %v451
    %v520 = vpop.f32.mrf.mxu0
    %v521 = vadd.f32 %v497, %v520
    %v522 = vpop.f32.mrf.mxu0
    %v523 = vadd.f32 %v497, %v522
    %524 = vmatmul.bf16.gmra.mxu0 %v454
    %v525 = vpop.f32.mrf.mxu0
    %v526 = vadd.f32 %v497, %v525
    %v527 = vpop.f32.mrf.mxu0
    %v528 = vadd.f32 %v497, %v527
    %529 = vmatmul.bf16.gmra.mxu0 %v457
    %v530 = vpop.f32.mrf.mxu0
    %v531 = vadd.f32 %v497, %v530
    %v532 = vpop.f32.mrf.mxu0
    %v533 = vadd.f32 %v497, %v532
    %534 = vmatmul.bf16.gmra.mxu0 %v460
    %v535 = vpop.f32.mrf.mxu0
    %v536 = vadd.f32 %v497, %v535
    %v537 = vpop.f32.mrf.mxu0
    %v538 = vadd.f32 %v497, %v537
    %539 = vdwg.mxu0
    %v542 = vunpack.c.l.b16 %v288
    %v543 = vunpack.c.l.b16 %v289
    %v544 = vpack.c.b16 %v543, %v542
    %546 = vmatpush.bf16.msra.mxu0 0
    %547 = vmatpush.bf16.msra.mxu0 0
    %548 = vmatpush.bf16.msra.mxu0 0
    %549 = vmatpush.bf16.msra.mxu0 0
    %550 = vmatpush.bf16.msra.mxu0 0
    %551 = vmatpush.bf16.msra.mxu0 0
    %552 = vmatpush.bf16.msra.mxu0 0
    %553 = vmatpush.bf16.msra.mxu0 %v544
    %554 = vmatmul.bf16.gmra.mxu0 %v389
    %v555 = vpop.f32.mrf.mxu0
    %v556 = vadd.f32 %v341, %v555
    %v557 = vpop.f32.mrf.mxu0
    %v558 = vadd.f32 %v343, %v557
    %559 = vmatmul.bf16.gmra.mxu0 %v392
    %v560 = vpop.f32.mrf.mxu0
    %v561 = vadd.f32 %v346, %v560
    %v562 = vpop.f32.mrf.mxu0
    %v563 = vadd.f32 %v348, %v562
    %564 = vmatmul.bf16.gmra.mxu0 %v395
    %v565 = vpop.f32.mrf.mxu0
    %v566 = vadd.f32 %v351, %v565
    %v567 = vpop.f32.mrf.mxu0
    %v568 = vadd.f32 %v353, %v567
    %569 = vmatmul.bf16.gmra.mxu0 %v398
    %v570 = vpop.f32.mrf.mxu0
    %v571 = vadd.f32 %v356, %v570
    %v572 = vpop.f32.mrf.mxu0
    %v573 = vadd.f32 %v358, %v572
    %574 = vdwg.mxu0
    %v575 = vmul.f32 %v556, %v521
    %v576 = vmul.f32 %v558, %v523
    %v577 = vmul.f32 %v561, %v526
    %v578 = vmul.f32 %v563, %v528
    %v579 = vmul.f32 %v566, %v531
    %v580 = vmul.f32 %v568, %v533
    %v581 = vmul.f32 %v571, %v536
    %v582 = vmul.f32 %v573, %v538
    %vm583 = vcmp.ge.f32.partialorder %v575, 0.0
    %vm584 = vcmp.ge.f32.partialorder %v576, 0.0
    %vm585 = vcmp.ge.f32.partialorder %v577, 0.0
    %vm586 = vcmp.ge.f32.partialorder %v578, 0.0
    %vm587 = vcmp.ge.f32.partialorder %v579, 0.0
    %vm588 = vcmp.ge.f32.partialorder %v580, 0.0
    %vm589 = vcmp.ge.f32.partialorder %v581, 0.0
    %vm590 = vcmp.ge.f32.partialorder %v582, 0.0
    %v591 = vsel %vm583, 1.0, -1.0
    %v592 = vsel %vm584, 1.0, -1.0
    %v593 = vsel %vm585, 1.0, -1.0
    %v594 = vsel %vm586, 1.0, -1.0
    %v595 = vsel %vm587, 1.0, -1.0
    %v596 = vsel %vm588, 1.0, -1.0
    %v597 = vsel %vm589, 1.0, -1.0
    %v598 = vsel %vm590, 1.0, -1.0
    %v599 = vand.u32 2147483647, %v575
    %v600 = vand.u32 2147483647, %v576
    %v601 = vand.u32 2147483647, %v577
    %v602 = vand.u32 2147483647, %v578
    %v603 = vand.u32 2147483647, %v579
    %v604 = vand.u32 2147483647, %v580
    %v605 = vand.u32 2147483647, %v581
    %v606 = vand.u32 2147483647, %v582
    %v607 = vrsqrt.pop %v599
    %v608 = vmul.f32 %v607, %v599
    %v609 = vmul.f32 %v608, %v607
    %v610 = vmul.f32 0.5, %v609
    %v611 = vsub.f32 1.5, %v610
    %v612 = vmul.f32 %v607, %v611
    %v613 = vmul.f32 %v599, %v612
    %vm614 = vcmp.eq.f32.partialorder %v599, inf
    %v615 = vsel %vm614, %v599, %v613
    %vm616 = vcmp.eq.f32.partialorder %v599, 0.0
    %v617 = vand.u32 %v599, 2147483648
    %v618 = vsel %vm616, %v617, %v615
    %v619 = vrsqrt.pop %v600
    %v620 = vmul.f32 %v619, %v600
    %v621 = vmul.f32 %v620, %v619
    %v622 = vmul.f32 0.5, %v621
    %v623 = vsub.f32 1.5, %v622
    %v624 = vmul.f32 %v619, %v623
    %v625 = vmul.f32 %v600, %v624
    %vm626 = vcmp.eq.f32.partialorder %v600, inf
    %v627 = vsel %vm626, %v600, %v625
    %vm628 = vcmp.eq.f32.partialorder %v600, 0.0
    %v629 = vand.u32 %v600, 2147483648
    %v630 = vsel %vm628, %v629, %v627
    %v631 = vrsqrt.pop %v601
    %v632 = vmul.f32 %v631, %v601
    %v633 = vmul.f32 %v632, %v631
    %v634 = vmul.f32 0.5, %v633
    %v635 = vsub.f32 1.5, %v634
    %v636 = vmul.f32 %v631, %v635
    %v637 = vmul.f32 %v601, %v636
    %vm638 = vcmp.eq.f32.partialorder %v601, inf
    %v639 = vsel %vm638, %v601, %v637
    %vm640 = vcmp.eq.f32.partialorder %v601, 0.0
    %v641 = vand.u32 %v601, 2147483648
    %v642 = vsel %vm640, %v641, %v639
    %v643 = vrsqrt.pop %v602
    %v644 = vmul.f32 %v643, %v602
    %v645 = vmul.f32 %v644, %v643
    %v646 = vmul.f32 0.5, %v645
    %v647 = vsub.f32 1.5, %v646
    %v648 = vmul.f32 %v643, %v647
    %v649 = vmul.f32 %v602, %v648
    %vm650 = vcmp.eq.f32.partialorder %v602, inf
    %v651 = vsel %vm650, %v602, %v649
    %vm652 = vcmp.eq.f32.partialorder %v602, 0.0
    %v653 = vand.u32 %v602, 2147483648
    %v654 = vsel %vm652, %v653, %v651
    %v655 = vrsqrt.pop %v603
    %v656 = vmul.f32 %v655, %v603
    %v657 = vmul.f32 %v656, %v655
    %v658 = vmul.f32 0.5, %v657
    %v659 = vsub.f32 1.5, %v658
    %v660 = vmul.f32 %v655, %v659
    %v661 = vmul.f32 %v603, %v660
    %vm662 = vcmp.eq.f32.partialorder %v603, inf
    %v663 = vsel %vm662, %v603, %v661
    %vm664 = vcmp.eq.f32.partialorder %v603, 0.0
    %v665 = vand.u32 %v603, 2147483648
    %v666 = vsel %vm664, %v665, %v663
    %v667 = vrsqrt.pop %v604
    %v668 = vmul.f32 %v667, %v604
    %v669 = vmul.f32 %v668, %v667
    %v670 = vmul.f32 0.5, %v669
    %v671 = vsub.f32 1.5, %v670
    %v672 = vmul.f32 %v667, %v671
    %v673 = vmul.f32 %v604, %v672
    %vm674 = vcmp.eq.f32.partialorder %v604, inf
    %v675 = vsel %vm674, %v604, %v673
    %vm676 = vcmp.eq.f32.partialorder %v604, 0.0
    %v677 = vand.u32 %v604, 2147483648
    %v678 = vsel %vm676, %v677, %v675
    %v679 = vrsqrt.pop %v605
    %v680 = vmul.f32 %v679, %v605
    %v681 = vmul.f32 %v680, %v679
    %v682 = vmul.f32 0.5, %v681
    %v683 = vsub.f32 1.5, %v682
    %v684 = vmul.f32 %v679, %v683
    %v685 = vmul.f32 %v605, %v684
    %vm686 = vcmp.eq.f32.partialorder %v605, inf
    %v687 = vsel %vm686, %v605, %v685
    %vm688 = vcmp.eq.f32.partialorder %v605, 0.0
    %v689 = vand.u32 %v605, 2147483648
    %v690 = vsel %vm688, %v689, %v687
    %v691 = vrsqrt.pop %v606
    %v692 = vmul.f32 %v691, %v606
    %v693 = vmul.f32 %v692, %v691
    %v694 = vmul.f32 0.5, %v693
    %v695 = vsub.f32 1.5, %v694
    %v696 = vmul.f32 %v691, %v695
    %v697 = vmul.f32 %v606, %v696
    %vm698 = vcmp.eq.f32.partialorder %v606, inf
    %v699 = vsel %vm698, %v606, %v697
    %vm700 = vcmp.eq.f32.partialorder %v606, 0.0
    %v701 = vand.u32 %v606, 2147483648
    %v702 = vsel %vm700, %v701, %v699
    %v703 = vmul.f32 %v591, %v618
    %v704 = vmul.f32 %v592, %v630
    %v705 = vmul.f32 %v593, %v642
    %v706 = vmul.f32 %v594, %v654
    %v707 = vmul.f32 %v595, %v666
    %v708 = vmul.f32 %v596, %v678
    %v709 = vmul.f32 %v597, %v690
    %v710 = vmul.f32 %v598, %v702
    %v711 = vadd.f32 %v703, %v472
    %v712 = vadd.f32 %v704, %v474
    %v713 = vadd.f32 %v705, %v477
    %v714 = vadd.f32 %v706, %v479
    %v715 = vadd.f32 %v707, %v482
    %v716 = vadd.f32 %v708, %v484
    %v717 = vadd.f32 %v709, %v487
    %v718 = vadd.f32 %v710, %v489
    %v719 = vmax.f32 %v711, 0.0
    %v720 = vmax.f32 %v712, 0.0
    %v721 = vmax.f32 %v713, 0.0
    %v722 = vmax.f32 %v714, 0.0
    %v723 = vmax.f32 %v715, 0.0
    %v724 = vmax.f32 %v716, 0.0
    %v725 = vmax.f32 %v717, 0.0
    %v726 = vmax.f32 %v718, 0.0
    %v727 = vld [vmem:[%s29] sm:$0x1]
    %v729 = vperm.slane %v727, 0
    %v731 = vmul.f32 %v719, %v729
    %v732 = vmul.f32 %v720, %v729
    %v733 = vmul.f32 %v721, %v729
    %v734 = vmul.f32 %v722, %v729
    %v735 = vmul.f32 %v723, %v729
    %v736 = vmul.f32 %v724, %v729
    %v737 = vmul.f32 %v725, %v729
    %v738 = vmul.f32 %v726, %v729
    %v739 = vpack.c.bf16 %v732, %v731
    %v740 = vpack.c.bf16 %v734, %v733
    %v741 = vpack.c.bf16 %v736, %v735
    %v742 = vpack.c.bf16 %v738, %v737
    %v743 = vld [vmem:[%s31] sm:$0xf]
    %v744 = vld [vmem:[%s31 + $0x4] sm:$0xf]
    %v745 = vld [vmem:[%s31 + $0x8] sm:$0xf]
    %v746 = vld [vmem:[%s31 + $0xc] sm:$0xf]
    %v751 = vunpack.c.l.b16 %v743
    %v752 = vunpack.c.l.b16 %v744
    %v753 = vunpack.c.l.b16 %v745
    %v754 = vunpack.c.l.b16 %v746
    %v755 = vpack.c.b16 %v752, %v751
    %v756 = vpack.c.b16 %v754, %v753
    %v760 = vsel %vm449, %v739, 0
    %v763 = vsel %vm449, %v740, 0
    %v766 = vsel %vm449, %v741, 0
    %v769 = vsel %vm449, %v742, 0
    %771 = vmatpush.bf16.msra.mxu0 0
    %772 = vmatpush.bf16.msra.mxu0 0
    %773 = vmatpush.bf16.msra.mxu0 0
    %774 = vmatpush.bf16.msra.mxu0 0
    %775 = vmatpush.bf16.msra.mxu0 0
    %776 = vmatpush.bf16.msra.mxu0 0
    %777 = vmatpush.bf16.msra.mxu0 %v756
    %778 = vmatpush.bf16.msra.mxu0 %v755
    %779 = vmatmul.bf16.gmra.mxu0 %v760
    %v780 = vpop.f32.mrf.mxu0
    %v781 = vadd.f32 0.0, %v780
    %v782 = vpop.f32.mrf.mxu0
    %v783 = vadd.f32 0.0, %v782
    %784 = vmatmul.bf16.gmra.mxu0 %v763
    %v785 = vpop.f32.mrf.mxu0
    %v786 = vadd.f32 0.0, %v785
    %v787 = vpop.f32.mrf.mxu0
    %v788 = vadd.f32 0.0, %v787
    %789 = vmatmul.bf16.gmra.mxu0 %v766
    %v790 = vpop.f32.mrf.mxu0
    %v791 = vadd.f32 0.0, %v790
    %v792 = vpop.f32.mrf.mxu0
    %v793 = vadd.f32 0.0, %v792
    %794 = vmatmul.bf16.gmra.mxu0 %v769
    %v795 = vpop.f32.mrf.mxu0
    %v796 = vadd.f32 0.0, %v795
    %v797 = vpop.f32.mrf.mxu0
    %v798 = vadd.f32 0.0, %v797
    %799 = vdwg.mxu0
    %v800 = vmax.f32 %v781, -5.0
    %v801 = vmax.f32 %v783, -5.0
    %v802 = vmax.f32 %v786, -5.0
    %v803 = vmax.f32 %v788, -5.0
    %v804 = vmax.f32 %v791, -5.0
    %v805 = vmax.f32 %v793, -5.0
    %v806 = vmax.f32 %v796, -5.0
    %v807 = vmax.f32 %v798, -5.0
    %v808 = vmin.f32 %v800, 5.0
    %v809 = vmin.f32 %v801, 5.0
    %v810 = vmin.f32 %v802, 5.0
    %v811 = vmin.f32 %v803, 5.0
    %v812 = vmin.f32 %v804, 5.0
    %v813 = vmin.f32 %v805, 5.0
    %v814 = vmin.f32 %v806, 5.0
    %v815 = vmin.f32 %v807, 5.0
    %v816 = vmul.f32 %v808, 1.442695
    %v817 = vpow.pop %v816
    %v818 = vmul.f32 %v809, 1.442695
    %v819 = vpow.pop %v818
    %v820 = vmul.f32 %v810, 1.442695
    %v821 = vpow.pop %v820
    %v822 = vmul.f32 %v811, 1.442695
    %v823 = vpow.pop %v822
    %v824 = vmul.f32 %v812, 1.442695
    %v825 = vpow.pop %v824
    %v826 = vmul.f32 %v813, 1.442695
    %v827 = vpow.pop %v826
    %v828 = vmul.f32 %v814, 1.442695
    %v829 = vpow.pop %v828
    %v830 = vmul.f32 %v815, 1.442695
    %v831 = vpow.pop %v830
    %v832 = vmul.f32 %v410, %v817
    %v833 = vmul.f32 %v412, %v819
    %v834 = vmul.f32 %v415, %v821
    %v835 = vmul.f32 %v417, %v823
    %v836 = vmul.f32 %v420, %v825
    %v837 = vmul.f32 %v422, %v827
    %v838 = vmul.f32 %v425, %v829
    %v839 = vmul.f32 %v427, %v831
    %848 = vrot.lane.b32.xlu0 %v817, 32
    %v849 = vpop.permute.xlu0 %848
    %850 = vrot.lane.b32.xlu0 %v819, 32
    %v851 = vpop.permute.xlu0 %850
    %852 = vrot.lane.b32.xlu0 %v821, 32
    %v853 = vpop.permute.xlu0 %852
    %854 = vrot.lane.b32.xlu0 %v823, 32
    %v855 = vpop.permute.xlu0 %854
    %856 = vrot.lane.b32.xlu0 %v825, 32
    %v857 = vpop.permute.xlu0 %856
    %858 = vrot.lane.b32.xlu0 %v827, 32
    %v859 = vpop.permute.xlu0 %858
    %860 = vrot.lane.b32.xlu0 %v829, 32
    %v861 = vpop.permute.xlu0 %860
    %862 = vrot.lane.b32.xlu0 %v831, 32
    %v863 = vpop.permute.xlu0 %862
    %v872 = vsel %vm449, %v832, %v849
    %v873 = vsel %vm449, %v833, %v851
    %v874 = vsel %vm449, %v834, %v853
    %v875 = vsel %vm449, %v835, %v855
    %v876 = vsel %vm449, %v836, %v857
    %v877 = vsel %vm449, %v837, %v859
    %v878 = vsel %vm449, %v838, %v861
    %v879 = vsel %vm449, %v839, %v863
    %v880 = vpack.c.bf16 %v873, %v872
    %v881 = vpack.c.bf16 %v875, %v874
    %v882 = vpack.c.bf16 %v877, %v876
    %v883 = vpack.c.bf16 %v879, %v878
    %v884 = vld [vmem:[#allocation5] sm:$0xff]
    %v885 = vld [vmem:[#allocation5 + $0x8] sm:$0xff]
    %890 = vxpose.xlu0.c.b16.start [1/8] %v308, 128
    %891 = vxpose.xlu0.c.b16.cont [2/8] %v309, 128
    %892 = vxpose.xlu0.c.b16.cont [3/8] %v310, 128
    %893 = vxpose.xlu0.c.b16.cont [4/8] %v311, 128
    %894 = vxpose.xlu0.c.b16.cont [5/8] 0, 128
    %895 = vxpose.xlu0.c.b16.cont [6/8] 0, 128
    %896 = vxpose.xlu0.c.b16.cont [7/8] 0, 128
    %897 = vxpose.xlu0.c.b16.end [8/8] 0, 128
    %v898 = vpop.trf.xlu0
    %v899 = vpop.trf.xlu0
    %v900 = vpop.trf.xlu0
    %v901 = vpop.trf.xlu0
    %v902 = vpop.trf.xlu0
    %v903 = vpop.trf.xlu0
    %v904 = vpop.trf.xlu0
    %v905 = vpop.trf.xlu0
    %vm906 = vcmask 523264
    %v908 = vsel %vm906, %v898, 0
    %910 = vmatpush.bf16.msra.mxu0 0
    %911 = vmatpush.bf16.msra.mxu0 0
    %912 = vmatpush.bf16.msra.mxu0 0
    %913 = vmatpush.bf16.msra.mxu0 0
    %914 = vmatpush.bf16.msra.mxu0 %v883
    %915 = vmatpush.bf16.msra.mxu0 %v882
    %916 = vmatpush.bf16.msra.mxu0 %v881
    %917 = vmatpush.bf16.msra.mxu0 %v880
    %918 = vmatmul.bf16.gmra.mxu0 %v908
    %v919 = vpop.f32.mrf.mxu0
    %v920 = vadd.f32 0.0, %v919
    %v921 = vpop.f32.mrf.mxu0
    %v922 = vadd.f32 0.0, %v921
    %923 = vdwg.mxu0
    %v924 = vadd.f32 %v884, %v920
    %v925 = vadd.f32 %v885, %v922
    %926 = vst.msk [vmem:[#allocation5] sm:$0xff] %vm906, %v924
    %927 = vst.msk [vmem:[#allocation5 + $0x8] sm:$0xff] %vm906, %v925
    %v928 = vpack.c.bf16 %v720, %v719
    %v929 = vpack.c.bf16 %v722, %v721
    %v930 = vpack.c.bf16 %v724, %v723
    %v931 = vpack.c.bf16 %v726, %v725
    %v932 = vld [vmem:[%s27] sm:$0xf]
    %v933 = vld [vmem:[%s27 + $0x4] sm:$0xf]
    %v934 = vld [vmem:[%s27 + $0x8] sm:$0xf]
    %v935 = vld [vmem:[%s27 + $0xc] sm:$0xf]
    %v940 = vunpack.c.l.b16 %v932
    %v941 = vunpack.c.l.b16 %v933
    %v942 = vunpack.c.l.b16 %v934
    %v943 = vunpack.c.l.b16 %v935
    %v944 = vpack.c.b16 %v941, %v940
    %v945 = vpack.c.b16 %v943, %v942
    %v949 = vsel %vm449, %v928, 0
    %v952 = vsel %vm449, %v929, 0
    %v955 = vsel %vm449, %v930, 0
    %v958 = vsel %vm449, %v931, 0
    %960 = vmatpush.bf16.msra.mxu0 0
    %961 = vmatpush.bf16.msra.mxu0 0
    %962 = vmatpush.bf16.msra.mxu0 0
    %963 = vmatpush.bf16.msra.mxu0 0
    %964 = vmatpush.bf16.msra.mxu0 0
    %965 = vmatpush.bf16.msra.mxu0 0
    %966 = vmatpush.bf16.msra.mxu0 %v945
    %967 = vmatpush.bf16.msra.mxu0 %v944
    %968 = vmatmul.bf16.gmra.mxu0 %v949
    %v969 = vpop.f32.mrf.mxu0
    %v970 = vadd.f32 %v276, %v969
    %v971 = vpop.f32.mrf.mxu0
    %v972 = vadd.f32 %v277, %v971
    %973 = vmatmul.bf16.gmra.mxu0 %v952
    %v974 = vpop.f32.mrf.mxu0
    %v975 = vadd.f32 %v278, %v974
    %v976 = vpop.f32.mrf.mxu0
    %v977 = vadd.f32 %v279, %v976
    %978 = vmatmul.bf16.gmra.mxu0 %v955
    %v979 = vpop.f32.mrf.mxu0
    %v980 = vadd.f32 %v280, %v979
    %v981 = vpop.f32.mrf.mxu0
    %v982 = vadd.f32 %v281, %v981
    %983 = vmatmul.bf16.gmra.mxu0 %v958
    %v984 = vpop.f32.mrf.mxu0
    %v985 = vadd.f32 %v282, %v984
    %v986 = vpop.f32.mrf.mxu0
    %v987 = vadd.f32 %v283, %v986
    %988 = vdwg.mxu0
    %v989 = vld [vmem:[%s57] sm:$0x1]
    %v990 = vld [vmem:[%s59] sm:$0x1]
    %v991 = vsel %vm449, %v970, 0.0
    %992 = vadd.xlane.f32.xlu0 %v991
    %v993 = vpop.xlane.xlu0 %992
    %v994 = vsel %vm449, %v972, 0.0
    %995 = vadd.xlane.f32.xlu0 %v994
    %v996 = vpop.xlane.xlu0 %995
    %v997 = vsel %vm449, %v975, 0.0
    %998 = vadd.xlane.f32.xlu0 %v997
    %v999 = vpop.xlane.xlu0 %998
    %v1000 = vsel %vm449, %v977, 0.0
    %1001 = vadd.xlane.f32.xlu0 %v1000
    %v1002 = vpop.xlane.xlu0 %1001
    %v1003 = vsel %vm449, %v980, 0.0
    %1004 = vadd.xlane.f32.xlu0 %v1003
    %v1005 = vpop.xlane.xlu0 %1004
    %v1006 = vsel %vm449, %v982, 0.0
    %1007 = vadd.xlane.f32.xlu0 %v1006
    %v1008 = vpop.xlane.xlu0 %1007
    %v1009 = vsel %vm449, %v985, 0.0
    %1010 = vadd.xlane.f32.xlu0 %v1009
    %v1011 = vpop.xlane.xlu0 %1010
    %v1012 = vsel %vm449, %v987, 0.0
    %1013 = vadd.xlane.f32.xlu0 %v1012
    %v1014 = vpop.xlane.xlu0 %1013
    %v1015 = vrcp.pop 32.0
    %v1016 = vmul.f32 32.0, %v1015
    %v1017 = vsub.f32 1.0, %v1016
    %v1018 = vmul.f32 %v1015, %v1017
    %v1019 = vadd.f32 %v1015, %v1018
    %vm1020 = vweird.f32 %v1015
    %v1021 = vsel %vm1020, %v1015, %v1019
    %v1022 = vmul.f32 %v993, %v1021
    %v1023 = vmul.f32 %v996, %v1021
    %v1024 = vmul.f32 %v999, %v1021
    %v1025 = vmul.f32 %v1002, %v1021
    %v1026 = vmul.f32 %v1005, %v1021
    %v1027 = vmul.f32 %v1008, %v1021
    %v1028 = vmul.f32 %v1011, %v1021
    %v1029 = vmul.f32 %v1014, %v1021
    %v1030 = vsub.f32 %v970, %v1022
    %v1031 = vsub.f32 %v972, %v1023
    %v1032 = vsub.f32 %v975, %v1024
    %v1033 = vsub.f32 %v977, %v1025
    %v1034 = vsub.f32 %v980, %v1026
    %v1035 = vsub.f32 %v982, %v1027
    %v1036 = vsub.f32 %v985, %v1028
    %v1037 = vsub.f32 %v987, %v1029
    %v1038 = vmul.f32 %v1030, %v1030
    %v1039 = vmul.f32 %v1031, %v1031
    %v1040 = vmul.f32 %v1032, %v1032
    %v1041 = vmul.f32 %v1033, %v1033
    %v1042 = vmul.f32 %v1034, %v1034
    %v1043 = vmul.f32 %v1035, %v1035
    %v1044 = vmul.f32 %v1036, %v1036
    %v1045 = vmul.f32 %v1037, %v1037
    %v1046 = vsel %vm449, %v1038, 0.0
    %1047 = vadd.xlane.f32.xlu0 %v1046
    %v1048 = vpop.xlane.xlu0 %1047
    %v1049 = vsel %vm449, %v1039, 0.0
    %1050 = vadd.xlane.f32.xlu0 %v1049
    %v1051 = vpop.xlane.xlu0 %1050
    %v1052 = vsel %vm449, %v1040, 0.0
    %1053 = vadd.xlane.f32.xlu0 %v1052
    %v1054 = vpop.xlane.xlu0 %1053
    %v1055 = vsel %vm449, %v1041, 0.0
    %1056 = vadd.xlane.f32.xlu0 %v1055
    %v1057 = vpop.xlane.xlu0 %1056
    %v1058 = vsel %vm449, %v1042, 0.0
    %1059 = vadd.xlane.f32.xlu0 %v1058
    %v1060 = vpop.xlane.xlu0 %1059
    %v1061 = vsel %vm449, %v1043, 0.0
    %1062 = vadd.xlane.f32.xlu0 %v1061
    %v1063 = vpop.xlane.xlu0 %1062
    %v1064 = vsel %vm449, %v1044, 0.0
    %1065 = vadd.xlane.f32.xlu0 %v1064
    %v1066 = vpop.xlane.xlu0 %1065
    %v1067 = vsel %vm449, %v1045, 0.0
    %1068 = vadd.xlane.f32.xlu0 %v1067
    %v1069 = vpop.xlane.xlu0 %1068
    %v1070 = vmul.f32 %v1048, %v1021
    %v1071 = vmul.f32 %v1051, %v1021
    %v1072 = vmul.f32 %v1054, %v1021
    %v1073 = vmul.f32 %v1057, %v1021
    %v1074 = vmul.f32 %v1060, %v1021
    %v1075 = vmul.f32 %v1063, %v1021
    %v1076 = vmul.f32 %v1066, %v1021
    %v1077 = vmul.f32 %v1069, %v1021
    %v1078 = vadd.f32 %v1070, 1e-05
    %v1079 = vadd.f32 %v1071, 1e-05
    %v1080 = vadd.f32 %v1072, 1e-05
    %v1081 = vadd.f32 %v1073, 1e-05
    %v1082 = vadd.f32 %v1074, 1e-05
    %v1083 = vadd.f32 %v1075, 1e-05
    %v1084 = vadd.f32 %v1076, 1e-05
    %v1085 = vadd.f32 %v1077, 1e-05
    %v1086 = vrsqrt.pop %v1078
    %v1087 = vmul.f32 %v1086, %v1078
    %v1088 = vmul.f32 %v1087, %v1086
    %v1089 = vmul.f32 0.5, %v1088
    %v1090 = vsub.f32 1.5, %v1089
    %v1091 = vmul.f32 %v1086, %v1090
    %vm1092 = vweird.f32 %v1078
    %vm1093 = vweird.f32 %v1086
    %vm1094 = vmor %vm1092, %vm1093
    %v1095 = vsel %vm1094, %v1086, %v1091
    %v1096 = vrsqrt.pop %v1079
    %v1097 = vmul.f32 %v1096, %v1079
    %v1098 = vmul.f32 %v1097, %v1096
    %v1099 = vmul.f32 0.5, %v1098
    %v1100 = vsub.f32 1.5, %v1099
    %v1101 = vmul.f32 %v1096, %v1100
    %vm1102 = vweird.f32 %v1079
    %vm1103 = vweird.f32 %v1096
    %vm1104 = vmor %vm1102, %vm1103
    %v1105 = vsel %vm1104, %v1096, %v1101
    %v1106 = vrsqrt.pop %v1080
    %v1107 = vmul.f32 %v1106, %v1080
    %v1108 = vmul.f32 %v1107, %v1106
    %v1109 = vmul.f32 0.5, %v1108
    %v1110 = vsub.f32 1.5, %v1109
    %v1111 = vmul.f32 %v1106, %v1110
    %vm1112 = vweird.f32 %v1080
    %vm1113 = vweird.f32 %v1106
    %vm1114 = vmor %vm1112, %vm1113
    %v1115 = vsel %vm1114, %v1106, %v1111
    %v1116 = vrsqrt.pop %v1081
    %v1117 = vmul.f32 %v1116, %v1081
    %v1118 = vmul.f32 %v1117, %v1116
    %v1119 = vmul.f32 0.5, %v1118
    %v1120 = vsub.f32 1.5, %v1119
    %v1121 = vmul.f32 %v1116, %v1120
    %vm1122 = vweird.f32 %v1081
    %vm1123 = vweird.f32 %v1116
    %vm1124 = vmor %vm1122, %vm1123
    %v1125 = vsel %vm1124, %v1116, %v1121
    %v1126 = vrsqrt.pop %v1082
    %v1127 = vmul.f32 %v1126, %v1082
    %v1128 = vmul.f32 %v1127, %v1126
    %v1129 = vmul.f32 0.5, %v1128
    %v1130 = vsub.f32 1.5, %v1129
    %v1131 = vmul.f32 %v1126, %v1130
    %vm1132 = vweird.f32 %v1082
    %vm1133 = vweird.f32 %v1126
    %vm1134 = vmor %vm1132, %vm1133
    %v1135 = vsel %vm1134, %v1126, %v1131
    %v1136 = vrsqrt.pop %v1083
    %v1137 = vmul.f32 %v1136, %v1083
    %v1138 = vmul.f32 %v1137, %v1136
    %v1139 = vmul.f32 0.5, %v1138
    %v1140 = vsub.f32 1.5, %v1139
    %v1141 = vmul.f32 %v1136, %v1140
    %vm1142 = vweird.f32 %v1083
    %vm1143 = vweird.f32 %v1136
    %vm1144 = vmor %vm1142, %vm1143
    %v1145 = vsel %vm1144, %v1136, %v1141
    %v1146 = vrsqrt.pop %v1084
    %v1147 = vmul.f32 %v1146, %v1084
    %v1148 = vmul.f32 %v1147, %v1146
    %v1149 = vmul.f32 0.5, %v1148
    %v1150 = vsub.f32 1.5, %v1149
    %v1151 = vmul.f32 %v1146, %v1150
    %vm1152 = vweird.f32 %v1084
    %vm1153 = vweird.f32 %v1146
    %vm1154 = vmor %vm1152, %vm1153
    %v1155 = vsel %vm1154, %v1146, %v1151
    %v1156 = vrsqrt.pop %v1085
    %v1157 = vmul.f32 %v1156, %v1085
    %v1158 = vmul.f32 %v1157, %v1156
    %v1159 = vmul.f32 0.5, %v1158
    %v1160 = vsub.f32 1.5, %v1159
    %v1161 = vmul.f32 %v1156, %v1160
    %vm1162 = vweird.f32 %v1085
    %vm1163 = vweird.f32 %v1156
    %vm1164 = vmor %vm1162, %vm1163
    %v1165 = vsel %vm1164, %v1156, %v1161
    %v1166 = vmul.f32 %v1030, %v1095
    %v1167 = vmul.f32 %v1031, %v1105
    %v1168 = vmul.f32 %v1032, %v1115
    %v1169 = vmul.f32 %v1033, %v1125
    %v1170 = vmul.f32 %v1034, %v1135
    %v1171 = vmul.f32 %v1035, %v1145
    %v1172 = vmul.f32 %v1036, %v1155
    %v1173 = vmul.f32 %v1037, %v1165
    %v1175 = vperm.slane %v989, 0
    %v1177 = vmul.f32 %v1166, %v1175
    %v1178 = vmul.f32 %v1167, %v1175
    %v1179 = vmul.f32 %v1168, %v1175
    %v1180 = vmul.f32 %v1169, %v1175
    %v1181 = vmul.f32 %v1170, %v1175
    %v1182 = vmul.f32 %v1171, %v1175
    %v1183 = vmul.f32 %v1172, %v1175
    %v1184 = vmul.f32 %v1173, %v1175
    %v1186 = vperm.slane %v990, 0
    %v1188 = vadd.f32 %v1177, %v1186
    %v1189 = vadd.f32 %v1178, %v1186
    %v1190 = vadd.f32 %v1179, %v1186
    %v1191 = vadd.f32 %v1180, %v1186
    %v1192 = vadd.f32 %v1181, %v1186
    %v1193 = vadd.f32 %v1182, %v1186
    %v1194 = vadd.f32 %v1183, %v1186
    %v1195 = vadd.f32 %v1184, %v1186
    %v1196 = vld [vmem:[%s49] sm:$0xf]
    %v1197 = vld [vmem:[%s49 + $0x4] sm:$0xf]
    %v1198 = vld [vmem:[%s49 + $0x8] sm:$0xf]
    %v1199 = vld [vmem:[%s49 + $0xc] sm:$0xf]
    %v1200 = vld [vmem:[%s51] sm:$0x1]
    %v1201 = vld [vmem:[%s53] sm:$0xf]
    %v1202 = vld [vmem:[%s53 + $0x4] sm:$0xf]
    %v1203 = vld [vmem:[%s53 + $0x8] sm:$0xf]
    %v1204 = vld [vmem:[%s53 + $0xc] sm:$0xf]
    %v1205 = vld [vmem:[%s53 + $0x10] sm:$0xf]
    %v1206 = vld [vmem:[%s53 + $0x14] sm:$0xf]
    %v1207 = vld [vmem:[%s53 + $0x18] sm:$0xf]
    %v1208 = vld [vmem:[%s53 + $0x1c] sm:$0xf]
    %v1209 = vld [vmem:[%s55] sm:$0x1]
    %v1210 = vpack.c.bf16 %v1189, %v1188
    %v1211 = vpack.c.bf16 %v1191, %v1190
    %v1212 = vpack.c.bf16 %v1193, %v1192
    %v1213 = vpack.c.bf16 %v1195, %v1194
    %v1215 = vperm.slane %v1200, 0
    %v1221 = vunpack.c.l.b16 %v1196
    %v1222 = vunpack.c.l.b16 %v1197
    %v1223 = vunpack.c.l.b16 %v1198
    %v1224 = vunpack.c.l.b16 %v1199
    %v1225 = vpack.c.b16 %v1222, %v1221
    %v1226 = vpack.c.b16 %v1224, %v1223
    %v1230 = vsel %vm449, %v1210, 0
    %v1233 = vsel %vm449, %v1211, 0
    %v1236 = vsel %vm449, %v1212, 0
    %v1239 = vsel %vm449, %v1213, 0
    %1241 = vmatpush.bf16.msra.mxu0 0
    %1242 = vmatpush.bf16.msra.mxu0 0
    %1243 = vmatpush.bf16.msra.mxu0 0
    %1244 = vmatpush.bf16.msra.mxu0 0
    %1245 = vmatpush.bf16.msra.mxu0 0
    %1246 = vmatpush.bf16.msra.mxu0 0
    %1247 = vmatpush.bf16.msra.mxu0 %v1226
    %1248 = vmatpush.bf16.msra.mxu0 %v1225
    %1249 = vmatmul.bf16.gmra.mxu0 %v1230
    %v1250 = vpop.f32.mrf.mxu0
    %v1251 = vadd.f32 %v1215, %v1250
    %v1252 = vpop.f32.mrf.mxu0
    %v1253 = vadd.f32 %v1215, %v1252
    %1254 = vmatmul.bf16.gmra.mxu0 %v1233
    %v1255 = vpop.f32.mrf.mxu0
    %v1256 = vadd.f32 %v1215, %v1255
    %v1257 = vpop.f32.mrf.mxu0
    %v1258 = vadd.f32 %v1215, %v1257
    %1259 = vmatmul.bf16.gmra.mxu0 %v1236
    %v1260 = vpop.f32.mrf.mxu0
    %v1261 = vadd.f32 %v1215, %v1260
    %v1262 = vpop.f32.mrf.mxu0
    %v1263 = vadd.f32 %v1215, %v1262
    %1264 = vmatmul.bf16.gmra.mxu0 %v1239
    %v1265 = vpop.f32.mrf.mxu0
    %v1266 = vadd.f32 %v1215, %v1265
    %v1267 = vpop.f32.mrf.mxu0
    %v1268 = vadd.f32 %v1215, %v1267
    %1269 = vdwg.mxu0
    %v1270 = vmax.f32 %v1251, 0.0
    %v1271 = vmax.f32 %v1253, 0.0
    %v1272 = vmax.f32 %v1256, 0.0
    %v1273 = vmax.f32 %v1258, 0.0
    %v1274 = vmax.f32 %v1261, 0.0
    %v1275 = vmax.f32 %v1263, 0.0
    %v1276 = vmax.f32 %v1266, 0.0
    %v1277 = vmax.f32 %v1268, 0.0
    %v1278 = vpack.c.bf16 %v1271, %v1270
    %v1279 = vpack.c.bf16 %v1273, %v1272
    %v1280 = vpack.c.bf16 %v1275, %v1274
    %v1281 = vpack.c.bf16 %v1277, %v1276
    %v1283 = vperm.slane %v1209, 0
    %v1293 = vunpack.c.l.b16 %v1201
    %v1294 = vunpack.c.l.b16 %v1202
    %v1295 = vunpack.c.l.b16 %v1203
    %v1296 = vunpack.c.l.b16 %v1204
    %v1297 = vunpack.c.l.b16 %v1205
    %v1298 = vunpack.c.l.b16 %v1206
    %v1299 = vunpack.c.l.b16 %v1207
    %v1300 = vunpack.c.l.b16 %v1208
    %v1301 = vpack.c.b16 %v1294, %v1293
    %v1302 = vpack.c.b16 %v1296, %v1295
    %v1303 = vpack.c.b16 %v1298, %v1297
    %v1304 = vpack.c.b16 %v1300, %v1299
    %v1310 = vsel %vm906, %v1278, 0
    %v1313 = vsel %vm906, %v1279, 0
    %v1316 = vsel %vm906, %v1280, 0
    %v1319 = vsel %vm906, %v1281, 0
    %1321 = vmatpush.bf16.msra.mxu0 0
    %1322 = vmatpush.bf16.msra.mxu0 0
    %1323 = vmatpush.bf16.msra.mxu0 0
    %1324 = vmatpush.bf16.msra.mxu0 0
    %1325 = vmatpush.bf16.msra.mxu0 %v1304
    %1326 = vmatpush.bf16.msra.mxu0 %v1303
    %1327 = vmatpush.bf16.msra.mxu0 %v1302
    %1328 = vmatpush.bf16.msra.mxu0 %v1301
    %1329 = vmatmul.bf16.gmra.mxu0 %v1310
    %v1330 = vpop.f32.mrf.mxu0
    %v1331 = vadd.f32 %v1283, %v1330
    %v1332 = vpop.f32.mrf.mxu0
    %v1333 = vadd.f32 %v1283, %v1332
    %1334 = vmatmul.bf16.gmra.mxu0 %v1313
    %v1335 = vpop.f32.mrf.mxu0
    %v1336 = vadd.f32 %v1283, %v1335
    %v1337 = vpop.f32.mrf.mxu0
    %v1338 = vadd.f32 %v1283, %v1337
    %1339 = vmatmul.bf16.gmra.mxu0 %v1316
    %v1340 = vpop.f32.mrf.mxu0
    %v1341 = vadd.f32 %v1283, %v1340
    %v1342 = vpop.f32.mrf.mxu0
    %v1343 = vadd.f32 %v1283, %v1342
    %1344 = vmatmul.bf16.gmra.mxu0 %v1319
    %v1345 = vpop.f32.mrf.mxu0
    %v1346 = vadd.f32 %v1283, %v1345
    %v1347 = vpop.f32.mrf.mxu0
    %v1348 = vadd.f32 %v1283, %v1347
    %1349 = vdwg.mxu0
    %v1350 = vadd.f32 %v1188, %v1331
    %v1351 = vadd.f32 %v1189, %v1333
    %v1352 = vadd.f32 %v1190, %v1336
    %v1353 = vadd.f32 %v1191, %v1338
    %v1354 = vadd.f32 %v1192, %v1341
    %v1355 = vadd.f32 %v1193, %v1343
    %v1356 = vadd.f32 %v1194, %v1346
    %v1357 = vadd.f32 %v1195, %v1348
    %v1358 = vld [vmem:[%s61] sm:$0x1]
    %v1359 = vld [vmem:[%s63] sm:$0x1]
    %v1360 = vsel %vm449, %v1350, 0.0
    %1361 = vadd.xlane.f32.xlu0 %v1360
    %v1362 = vpop.xlane.xlu0 %1361
    %v1363 = vsel %vm449, %v1351, 0.0
    %1364 = vadd.xlane.f32.xlu0 %v1363
    %v1365 = vpop.xlane.xlu0 %1364
    %v1366 = vsel %vm449, %v1352, 0.0
    %1367 = vadd.xlane.f32.xlu0 %v1366
    %v1368 = vpop.xlane.xlu0 %1367
    %v1369 = vsel %vm449, %v1353, 0.0
    %1370 = vadd.xlane.f32.xlu0 %v1369
    %v1371 = vpop.xlane.xlu0 %1370
    %v1372 = vsel %vm449, %v1354, 0.0
    %1373 = vadd.xlane.f32.xlu0 %v1372
    %v1374 = vpop.xlane.xlu0 %1373
    %v1375 = vsel %vm449, %v1355, 0.0
    %1376 = vadd.xlane.f32.xlu0 %v1375
    %v1377 = vpop.xlane.xlu0 %1376
    %v1378 = vsel %vm449, %v1356, 0.0
    %1379 = vadd.xlane.f32.xlu0 %v1378
    %v1380 = vpop.xlane.xlu0 %1379
    %v1381 = vsel %vm449, %v1357, 0.0
    %1382 = vadd.xlane.f32.xlu0 %v1381
    %v1383 = vpop.xlane.xlu0 %1382
    %v1384 = vmul.f32 %v1362, %v1021
    %v1385 = vmul.f32 %v1365, %v1021
    %v1386 = vmul.f32 %v1368, %v1021
    %v1387 = vmul.f32 %v1371, %v1021
    %v1388 = vmul.f32 %v1374, %v1021
    %v1389 = vmul.f32 %v1377, %v1021
    %v1390 = vmul.f32 %v1380, %v1021
    %v1391 = vmul.f32 %v1383, %v1021
    %v1392 = vsub.f32 %v1350, %v1384
    %v1393 = vsub.f32 %v1351, %v1385
    %v1394 = vsub.f32 %v1352, %v1386
    %v1395 = vsub.f32 %v1353, %v1387
    %v1396 = vsub.f32 %v1354, %v1388
    %v1397 = vsub.f32 %v1355, %v1389
    %v1398 = vsub.f32 %v1356, %v1390
    %v1399 = vsub.f32 %v1357, %v1391
    %v1400 = vmul.f32 %v1392, %v1392
    %v1401 = vmul.f32 %v1393, %v1393
    %v1402 = vmul.f32 %v1394, %v1394
    %v1403 = vmul.f32 %v1395, %v1395
    %v1404 = vmul.f32 %v1396, %v1396
    %v1405 = vmul.f32 %v1397, %v1397
    %v1406 = vmul.f32 %v1398, %v1398
    %v1407 = vmul.f32 %v1399, %v1399
    %v1408 = vsel %vm449, %v1400, 0.0
    %1409 = vadd.xlane.f32.xlu0 %v1408
    %v1410 = vpop.xlane.xlu0 %1409
    %v1411 = vsel %vm449, %v1401, 0.0
    %1412 = vadd.xlane.f32.xlu0 %v1411
    %v1413 = vpop.xlane.xlu0 %1412
    %v1414 = vsel %vm449, %v1402, 0.0
    %1415 = vadd.xlane.f32.xlu0 %v1414
    %v1416 = vpop.xlane.xlu0 %1415
    %v1417 = vsel %vm449, %v1403, 0.0
    %1418 = vadd.xlane.f32.xlu0 %v1417
    %v1419 = vpop.xlane.xlu0 %1418
    %v1420 = vsel %vm449, %v1404, 0.0
    %1421 = vadd.xlane.f32.xlu0 %v1420
    %v1422 = vpop.xlane.xlu0 %1421
    %v1423 = vsel %vm449, %v1405, 0.0
    %1424 = vadd.xlane.f32.xlu0 %v1423
    %v1425 = vpop.xlane.xlu0 %1424
    %v1426 = vsel %vm449, %v1406, 0.0
    %1427 = vadd.xlane.f32.xlu0 %v1426
    %v1428 = vpop.xlane.xlu0 %1427
    %v1429 = vsel %vm449, %v1407, 0.0
    %1430 = vadd.xlane.f32.xlu0 %v1429
    %v1431 = vpop.xlane.xlu0 %1430
    %v1432 = vmul.f32 %v1410, %v1021
    %v1433 = vmul.f32 %v1413, %v1021
    %v1434 = vmul.f32 %v1416, %v1021
    %v1435 = vmul.f32 %v1419, %v1021
    %v1436 = vmul.f32 %v1422, %v1021
    %v1437 = vmul.f32 %v1425, %v1021
    %v1438 = vmul.f32 %v1428, %v1021
    %v1439 = vmul.f32 %v1431, %v1021
    %v1440 = vadd.f32 %v1432, 1e-05
    %v1441 = vadd.f32 %v1433, 1e-05
    %v1442 = vadd.f32 %v1434, 1e-05
    %v1443 = vadd.f32 %v1435, 1e-05
    %v1444 = vadd.f32 %v1436, 1e-05
    %v1445 = vadd.f32 %v1437, 1e-05
    %v1446 = vadd.f32 %v1438, 1e-05
    %v1447 = vadd.f32 %v1439, 1e-05
    %v1448 = vrsqrt.pop %v1440
    %v1449 = vmul.f32 %v1448, %v1440
    %v1450 = vmul.f32 %v1449, %v1448
    %v1451 = vmul.f32 0.5, %v1450
    %v1452 = vsub.f32 1.5, %v1451
    %v1453 = vmul.f32 %v1448, %v1452
    %vm1454 = vweird.f32 %v1440
    %vm1455 = vweird.f32 %v1448
    %vm1456 = vmor %vm1454, %vm1455
    %v1457 = vsel %vm1456, %v1448, %v1453
    %v1458 = vrsqrt.pop %v1441
    %v1459 = vmul.f32 %v1458, %v1441
    %v1460 = vmul.f32 %v1459, %v1458
    %v1461 = vmul.f32 0.5, %v1460
    %v1462 = vsub.f32 1.5, %v1461
    %v1463 = vmul.f32 %v1458, %v1462
    %vm1464 = vweird.f32 %v1441
    %vm1465 = vweird.f32 %v1458
    %vm1466 = vmor %vm1464, %vm1465
    %v1467 = vsel %vm1466, %v1458, %v1463
    %v1468 = vrsqrt.pop %v1442
    %v1469 = vmul.f32 %v1468, %v1442
    %v1470 = vmul.f32 %v1469, %v1468
    %v1471 = vmul.f32 0.5, %v1470
    %v1472 = vsub.f32 1.5, %v1471
    %v1473 = vmul.f32 %v1468, %v1472
    %vm1474 = vweird.f32 %v1442
    %vm1475 = vweird.f32 %v1468
    %vm1476 = vmor %vm1474, %vm1475
    %v1477 = vsel %vm1476, %v1468, %v1473
    %v1478 = vrsqrt.pop %v1443
    %v1479 = vmul.f32 %v1478, %v1443
    %v1480 = vmul.f32 %v1479, %v1478
    %v1481 = vmul.f32 0.5, %v1480
    %v1482 = vsub.f32 1.5, %v1481
    %v1483 = vmul.f32 %v1478, %v1482
    %vm1484 = vweird.f32 %v1443
    %vm1485 = vweird.f32 %v1478
    %vm1486 = vmor %vm1484, %vm1485
    %v1487 = vsel %vm1486, %v1478, %v1483
    %v1488 = vrsqrt.pop %v1444
    %v1489 = vmul.f32 %v1488, %v1444
    %v1490 = vmul.f32 %v1489, %v1488
    %v1491 = vmul.f32 0.5, %v1490
    %v1492 = vsub.f32 1.5, %v1491
    %v1493 = vmul.f32 %v1488, %v1492
    %vm1494 = vweird.f32 %v1444
    %vm1495 = vweird.f32 %v1488
    %vm1496 = vmor %vm1494, %vm1495
    %v1497 = vsel %vm1496, %v1488, %v1493
    %v1498 = vrsqrt.pop %v1445
    %v1499 = vmul.f32 %v1498, %v1445
    %v1500 = vmul.f32 %v1499, %v1498
    %v1501 = vmul.f32 0.5, %v1500
    %v1502 = vsub.f32 1.5, %v1501
    %v1503 = vmul.f32 %v1498, %v1502
    %vm1504 = vweird.f32 %v1445
    %vm1505 = vweird.f32 %v1498
    %vm1506 = vmor %vm1504, %vm1505
    %v1507 = vsel %vm1506, %v1498, %v1503
    %v1508 = vrsqrt.pop %v1446
    %v1509 = vmul.f32 %v1508, %v1446
    %v1510 = vmul.f32 %v1509, %v1508
    %v1511 = vmul.f32 0.5, %v1510
    %v1512 = vsub.f32 1.5, %v1511
    %v1513 = vmul.f32 %v1508, %v1512
    %vm1514 = vweird.f32 %v1446
    %vm1515 = vweird.f32 %v1508
    %vm1516 = vmor %vm1514, %vm1515
    %v1517 = vsel %vm1516, %v1508, %v1513
    %v1518 = vrsqrt.pop %v1447
    %v1519 = vmul.f32 %v1518, %v1447
    %v1520 = vmul.f32 %v1519, %v1518
    %v1521 = vmul.f32 0.5, %v1520
    %v1522 = vsub.f32 1.5, %v1521
    %v1523 = vmul.f32 %v1518, %v1522
    %vm1524 = vweird.f32 %v1447
    %vm1525 = vweird.f32 %v1518
    %vm1526 = vmor %vm1524, %vm1525
    %v1527 = vsel %vm1526, %v1518, %v1523
    %v1528 = vmul.f32 %v1392, %v1457
    %v1529 = vmul.f32 %v1393, %v1467
    %v1530 = vmul.f32 %v1394, %v1477
    %v1531 = vmul.f32 %v1395, %v1487
    %v1532 = vmul.f32 %v1396, %v1497
    %v1533 = vmul.f32 %v1397, %v1507
    %v1534 = vmul.f32 %v1398, %v1517
    %v1535 = vmul.f32 %v1399, %v1527
    %v1537 = vperm.slane %v1358, 0
    %v1539 = vmul.f32 %v1528, %v1537
    %v1540 = vmul.f32 %v1529, %v1537
    %v1541 = vmul.f32 %v1530, %v1537
    %v1542 = vmul.f32 %v1531, %v1537
    %v1543 = vmul.f32 %v1532, %v1537
    %v1544 = vmul.f32 %v1533, %v1537
    %v1545 = vmul.f32 %v1534, %v1537
    %v1546 = vmul.f32 %v1535, %v1537
    %v1548 = vperm.slane %v1359, 0
    %v1550 = vadd.f32 %v1539, %v1548
    %v1551 = vadd.f32 %v1540, %v1548
    %v1552 = vadd.f32 %v1541, %v1548
    %v1553 = vadd.f32 %v1542, %v1548
    %v1554 = vadd.f32 %v1543, %v1548
    %v1555 = vadd.f32 %v1544, %v1548
    %v1556 = vadd.f32 %v1545, %v1548
    %v1557 = vadd.f32 %v1546, %v1548
    %1558 = vst.msk [vmem:[%s67] sm:$0xff] %vm449, %v1550
    %1559 = vst.msk [vmem:[%s67 + $0x8] sm:$0xff] %vm449, %v1551
    %1560 = vst.msk [vmem:[%s67 + $0x10] sm:$0xff] %vm449, %v1552
    %1561 = vst.msk [vmem:[%s67 + $0x18] sm:$0xff] %vm449, %v1553
    %1562 = vst.msk [vmem:[%s67 + $0x20] sm:$0xff] %vm449, %v1554
    %1563 = vst.msk [vmem:[%s67 + $0x28] sm:$0xff] %vm449, %v1555
    %1564 = vst.msk [vmem:[%s67 + $0x30] sm:$0xff] %vm449, %v1556
    %1565 = vst.msk [vmem:[%s67 + $0x38] sm:$0xff] %vm449, %v1557
    // Predicated region
    $region134: #{tpu_custom_call.1} parent=1 // pred_check
      %p1566 = pneg %p139
    $region135: #{tpu_custom_call.1} parent=1 // pred_check_branch
      %1568 = sbr.rel (%p1566) target = $region137
    $region136: #{tpu_custom_call.1} parent=1 // pred_region
      %v1569 = vld [vmem:[#allocation5] sm:$0xff]
      %v1570 = vld [vmem:[#allocation5 + $0x8] sm:$0xff]
      %vm1571 = vcmp.gt.f32.partialorder %v1569, 0.0
      %vm1572 = vcmp.gt.f32.partialorder %v1570, 0.0
      %v1573 = vadd.f32 %v1569, 1e-16
      %v1574 = vadd.f32 %v1570, 1e-16
      %v1575 = vrcp.pop %v1573
      %v1576 = vrcp.pop %v1574
      %v1577 = vsel %vm1571, %v1575, 0.0
      %v1578 = vsel %vm1572, %v1576, 0.0
      %1581 = vrot.lane.b32.xlu0 %v1577, 96
      %v1582 = vpop.permute.xlu0 %1581
      %1583 = vrot.lane.b32.xlu0 %v1578, 96
      %v1584 = vpop.permute.xlu0 %1583
      %v1587 = vmul.f32 %v1569, %v1582
      %v1588 = vmul.f32 %v1570, %v1584
      %v1589 = vpack.c.bf16 %v1588, %v1587
      %v1590 = vld [vmem:[%s25] sm:$0xf]
      %v1591 = vld [vmem:[%s25 + $0x4] sm:$0xf]
      %v1592 = vld [vmem:[%s25 + $0x8] sm:$0xf]
      %v1593 = vld [vmem:[%s25 + $0xc] sm:$0xf]
      %v1594 = vld [vmem:[%s1] sm:$0xff]
      %v1595 = vld [vmem:[%s1 + $0x8] sm:$0xff]
      %v1600 = vunpack.c.l.b16 %v1590
      %v1601 = vunpack.c.l.b16 %v1591
      %v1602 = vunpack.c.l.b16 %v1592
      %v1603 = vunpack.c.l.b16 %v1593
      %v1604 = vpack.c.b16 %v1601, %v1600
      %v1605 = vpack.c.b16 %v1603, %v1602
      %v1609 = vsel %vm449, %v1589, 0
      %1611 = vmatpush.bf16.msra.mxu0 0
      %1612 = vmatpush.bf16.msra.mxu0 0
      %1613 = vmatpush.bf16.msra.mxu0 0
      %1614 = vmatpush.bf16.msra.mxu0 0
      %1615 = vmatpush.bf16.msra.mxu0 0
      %1616 = vmatpush.bf16.msra.mxu0 0
      %1617 = vmatpush.bf16.msra.mxu0 %v1605
      %1618 = vmatpush.bf16.msra.mxu0 %v1604
      %1619 = vmatmul.bf16.gmra.mxu0 %v1609
      %v1620 = vpop.f32.mrf.mxu0
      %v1621 = vadd.f32 %v1594, %v1620
      %v1622 = vpop.f32.mrf.mxu0
      %v1623 = vadd.f32 %v1595, %v1622
      %1624 = vdwg.mxu0
      %v1625 = vld [vmem:[%s41] sm:$0x1]
      %v1626 = vld [vmem:[%s43] sm:$0x1]
      %v1627 = vsel %vm449, %v1621, 0.0
      %1628 = vadd.xlane.f32.xlu0 %v1627
      %v1629 = vpop.xlane.xlu0 %1628
      %v1630 = vsel %vm449, %v1623, 0.0
      %1631 = vadd.xlane.f32.xlu0 %v1630
      %v1632 = vpop.xlane.xlu0 %1631
      %v1633 = vmul.f32 %v1629, %v1021
      %v1634 = vmul.f32 %v1632, %v1021
      %v1635 = vsub.f32 %v1621, %v1633
      %v1636 = vsub.f32 %v1623, %v1634
      %v1637 = vmul.f32 %v1635, %v1635
      %v1638 = vmul.f32 %v1636, %v1636
      %v1639 = vsel %vm449, %v1637, 0.0
      %1640 = vadd.xlane.f32.xlu0 %v1639
      %v1641 = vpop.xlane.xlu0 %1640
      %v1642 = vsel %vm449, %v1638, 0.0
      %1643 = vadd.xlane.f32.xlu0 %v1642
      %v1644 = vpop.xlane.xlu0 %1643
      %v1645 = vmul.f32 %v1641, %v1021
      %v1646 = vmul.f32 %v1644, %v1021
      %v1647 = vadd.f32 %v1645, 1e-05
      %v1648 = vadd.f32 %v1646, 1e-05
      %v1649 = vrsqrt.pop %v1647
      %v1650 = vmul.f32 %v1649, %v1647
      %v1651 = vmul.f32 %v1650, %v1649
      %v1652 = vmul.f32 0.5, %v1651
      %v1653 = vsub.f32 1.5, %v1652
      %v1654 = vmul.f32 %v1649, %v1653
      %vm1655 = vweird.f32 %v1647
      %vm1656 = vweird.f32 %v1649
      %vm1657 = vmor %vm1655, %vm1656
      %v1658 = vsel %vm1657, %v1649, %v1654
      %v1659 = vrsqrt.pop %v1648
      %v1660 = vmul.f32 %v1659, %v1648
      %v1661 = vmul.f32 %v1660, %v1659
      %v1662 = vmul.f32 0.5, %v1661
      %v1663 = vsub.f32 1.5, %v1662
      %v1664 = vmul.f32 %v1659, %v1663
      %vm1665 = vweird.f32 %v1648
      %vm1666 = vweird.f32 %v1659
      %vm1667 = vmor %vm1665, %vm1666
      %v1668 = vsel %vm1667, %v1659, %v1664
      %v1669 = vmul.f32 %v1635, %v1658
      %v1670 = vmul.f32 %v1636, %v1668
      %v1672 = vperm.slane %v1625, 0
      %v1674 = vmul.f32 %v1669, %v1672
      %v1675 = vmul.f32 %v1670, %v1672
      %v1677 = vperm.slane %v1626, 0
      %v1679 = vadd.f32 %v1674, %v1677
      %v1680 = vadd.f32 %v1675, %v1677
      %v1681 = vld [vmem:[%s33] sm:$0xf]
      %v1682 = vld [vmem:[%s33 + $0x4] sm:$0xf]
      %v1683 = vld [vmem:[%s33 + $0x8] sm:$0xf]
      %v1684 = vld [vmem:[%s33 + $0xc] sm:$0xf]
      %v1685 = vld [vmem:[%s35] sm:$0x1]
      %v1686 = vld [vmem:[%s37] sm:$0xf]
      %v1687 = vld [vmem:[%s37 + $0x4] sm:$0xf]
      %v1688 = vld [vmem:[%s37 + $0x8] sm:$0xf]
      %v1689 = vld [vmem:[%s37 + $0xc] sm:$0xf]
      %v1690 = vld [vmem:[%s37 + $0x10] sm:$0xf]
      %v1691 = vld [vmem:[%s37 + $0x14] sm:$0xf]
      %v1692 = vld [vmem:[%s37 + $0x18] sm:$0xf]
      %v1693 = vld [vmem:[%s37 + $0x1c] sm:$0xf]
      %v1694 = vld [vmem:[%s39] sm:$0x1]
      %v1695 = vpack.c.bf16 %v1680, %v1679
      %v1697 = vperm.slane %v1685, 0
      %v1703 = vunpack.c.l.b16 %v1681
      %v1704 = vunpack.c.l.b16 %v1682
      %v1705 = vunpack.c.l.b16 %v1683
      %v1706 = vunpack.c.l.b16 %v1684
      %v1707 = vpack.c.b16 %v1704, %v1703
      %v1708 = vpack.c.b16 %v1706, %v1705
      %v1712 = vsel %vm449, %v1695, 0
      %1714 = vmatpush.bf16.msra.mxu0 0
      %1715 = vmatpush.bf16.msra.mxu0 0
      %1716 = vmatpush.bf16.msra.mxu0 0
      %1717 = vmatpush.bf16.msra.mxu0 0
      %1718 = vmatpush.bf16.msra.mxu0 0
      %1719 = vmatpush.bf16.msra.mxu0 0
      %1720 = vmatpush.bf16.msra.mxu0 %v1708
      %1721 = vmatpush.bf16.msra.mxu0 %v1707
      %1722 = vmatmul.bf16.gmra.mxu0 %v1712
      %v1723 = vpop.f32.mrf.mxu0
      %v1724 = vadd.f32 %v1697, %v1723
      %v1725 = vpop.f32.mrf.mxu0
      %v1726 = vadd.f32 %v1697, %v1725
      %1727 = vdwg.mxu0
      %v1728 = vmax.f32 %v1724, 0.0
      %v1729 = vmax.f32 %v1726, 0.0
      %v1730 = vpack.c.bf16 %v1729, %v1728
      %v1732 = vperm.slane %v1694, 0
      %v1742 = vunpack.c.l.b16 %v1686
      %v1743 = vunpack.c.l.b16 %v1687
      %v1744 = vunpack.c.l.b16 %v1688
      %v1745 = vunpack.c.l.b16 %v1689
      %v1746 = vunpack.c.l.b16 %v1690
      %v1747 = vunpack.c.l.b16 %v1691
      %v1748 = vunpack.c.l.b16 %v1692
      %v1749 = vunpack.c.l.b16 %v1693
      %v1750 = vpack.c.b16 %v1743, %v1742
      %v1751 = vpack.c.b16 %v1745, %v1744
      %v1752 = vpack.c.b16 %v1747, %v1746
      %v1753 = vpack.c.b16 %v1749, %v1748
      %v1759 = vsel %vm906, %v1730, 0
      %1761 = vmatpush.bf16.msra.mxu0 0
      %1762 = vmatpush.bf16.msra.mxu0 0
      %1763 = vmatpush.bf16.msra.mxu0 0
      %1764 = vmatpush.bf16.msra.mxu0 0
      %1765 = vmatpush.bf16.msra.mxu0 %v1753
      %1766 = vmatpush.bf16.msra.mxu0 %v1752
      %1767 = vmatpush.bf16.msra.mxu0 %v1751
      %1768 = vmatpush.bf16.msra.mxu0 %v1750
      %1769 = vmatmul.bf16.gmra.mxu0 %v1759
      %v1770 = vpop.f32.mrf.mxu0
      %v1771 = vadd.f32 %v1732, %v1770
      %v1772 = vpop.f32.mrf.mxu0
      %v1773 = vadd.f32 %v1732, %v1772
      %1774 = vdwg.mxu0
      %v1775 = vadd.f32 %v1679, %v1771
      %v1776 = vadd.f32 %v1680, %v1773
      %v1777 = vld [vmem:[%s45] sm:$0x1]
      %v1778 = vld [vmem:[%s47] sm:$0x1]
      %v1779 = vsel %vm449, %v1775, 0.0
      %1780 = vadd.xlane.f32.xlu0 %v1779
      %v1781 = vpop.xlane.xlu0 %1780
      %v1782 = vsel %vm449, %v1776, 0.0
      %1783 = vadd.xlane.f32.xlu0 %v1782
      %v1784 = vpop.xlane.xlu0 %1783
      %v1785 = vmul.f32 %v1781, %v1021
      %v1786 = vmul.f32 %v1784, %v1021
      %v1787 = vsub.f32 %v1775, %v1785
      %v1788 = vsub.f32 %v1776, %v1786
      %v1789 = vmul.f32 %v1787, %v1787
      %v1790 = vmul.f32 %v1788, %v1788
      %v1791 = vsel %vm449, %v1789, 0.0
      %1792 = vadd.xlane.f32.xlu0 %v1791
      %v1793 = vpop.xlane.xlu0 %1792
      %v1794 = vsel %vm449, %v1790, 0.0
      %1795 = vadd.xlane.f32.xlu0 %v1794
      %v1796 = vpop.xlane.xlu0 %1795
      %v1797 = vmul.f32 %v1793, %v1021
      %v1798 = vmul.f32 %v1796, %v1021
      %v1799 = vadd.f32 %v1797, 1e-05
      %v1800 = vadd.f32 %v1798, 1e-05
      %v1801 = vrsqrt.pop %v1799
      %v1802 = vmul.f32 %v1801, %v1799
      %v1803 = vmul.f32 %v1802, %v1801
      %v1804 = vmul.f32 0.5, %v1803
      %v1805 = vsub.f32 1.5, %v1804
      %v1806 = vmul.f32 %v1801, %v1805
      %vm1807 = vweird.f32 %v1799
      %vm1808 = vweird.f32 %v1801
      %vm1809 = vmor %vm1807, %vm1808
      %v1810 = vsel %vm1809, %v1801, %v1806
      %v1811 = vrsqrt.pop %v1800
      %v1812 = vmul.f32 %v1811, %v1800
      %v1813 = vmul.f32 %v1812, %v1811
      %v1814 = vmul.f32 0.5, %v1813
      %v1815 = vsub.f32 1.5, %v1814
      %v1816 = vmul.f32 %v1811, %v1815
      %vm1817 = vweird.f32 %v1800
      %vm1818 = vweird.f32 %v1811
      %vm1819 = vmor %vm1817, %vm1818
      %v1820 = vsel %vm1819, %v1811, %v1816
      %v1821 = vmul.f32 %v1787, %v1810
      %v1822 = vmul.f32 %v1788, %v1820
      %v1824 = vperm.slane %v1777, 0
      %v1826 = vmul.f32 %v1821, %v1824
      %v1827 = vmul.f32 %v1822, %v1824
      %v1829 = vperm.slane %v1778, 0
      %v1831 = vadd.f32 %v1826, %v1829
      %v1832 = vadd.f32 %v1827, %v1829
      %1833 = vst.msk [vmem:[#allocation6] sm:$0xff] %vm449, %v1831
      %1834 = vst.msk [vmem:[#allocation6 + $0x8] sm:$0xff] %vm449, %v1832
    $region137: #{tpu_custom_call.1} parent=1 // pred_fallthru
      _
    // Predicated region
    $region138: #{tpu_custom_call.1} parent=1 // pred_check
      _
    $region139: #{tpu_custom_call.1} parent=1 // pred_check_branch
      %1836 = sbr.rel (0) target = $region141
    $region140: #{tpu_custom_call.1} parent=1 // pred_region
      %1838 = vsyncadd [#allocation7], 0
      %s1839 = sshll.u32 [#allocation6], 4
      %s1840 = int_to_ptr.vmem [resolvable:$true] %s1839
      %s1841 = sshll.u32 %s65, 4
      %s1842 = int_to_ptr.hbm [resolvable:$true] %s1841
      %1847 = dma.vmem_to_hbm [thread:$0]  %s1840, 256, %s1842, [#allocation7], 128, 128, 8
    $region141: #{tpu_custom_call.1} parent=1 // pred_fallthru
      _
    // Predicated region
    $region142: #{tpu_custom_call.1} parent=1 // pred_check
      _
    $region143: #{tpu_custom_call.1} parent=1 // pred_check_branch
      %1849 = sbr.rel (0) target = $region145
    $region144: #{tpu_custom_call.1} parent=1 // pred_region
      _
    $region145: #{tpu_custom_call.1} parent=1 // pred_fallthru
      _
    // Predicated region
    $region146: #{tpu_custom_call.1} parent=1 // pred_check
      _
    $region147: #{tpu_custom_call.1} parent=1 // pred_check_branch
      %1851 = sbr.rel (0) target = $region149
    $region148: #{tpu_custom_call.1} parent=1 // pred_region
      %1853 = dma.done [#allocation7], 256
    $region149: #{tpu_custom_call.1} parent=1 // pred_fallthru
      _
    // Predicated region
    $region150: #{tpu_custom_call.1} parent=1 // pred_check
      _
    $region151: #{tpu_custom_call.1} parent=1 // pred_check_branch
      %1855 = sbr.rel (0) target = $region153
    $region152: #{tpu_custom_call.1} parent=1 // pred_region
      _
    $region153: #{tpu_custom_call.1} parent=1 // pred_fallthru
      _
    %1856 = vsyncpa [#allocation7], 1

</llo_original>
